<compile_context>
chip_gen: v5e
topology: v5e:2x2
jax: 0.10.0
libtpu: 0.0.40
codegen_flags: <defaults>
</compile_context>

<pallas_src>
import functools

import jax
import jax.numpy as jnp
from jax.experimental import pallas as pl
from jax.experimental.pallas import tpu as pltpu

# Safe scoped-VMEM budget on v5e / v6e / v7x (v7x physical VMEM is only 64 MiB).
VMEM_LIMIT_BYTES = 32 * 1024 * 1024
MAX_BATCH_TILE = 64


def _round_up(x, m):
    return (x + m - 1) // m * m


def _batch_tile(batch):
    """Batch-tile size: full batch when tiny, else a multiple of 8 giving >=2 grid steps."""
    if batch <= 8:
        return batch
    return min(MAX_BATCH_TILE, _round_up(-(-batch // 2), 8))


# ---------------------------------------------------------------------------
# Kernel 1: stride-1 conv (kp x kp taps) + bias + ReLU, NHWC, in-VMEM im2col.
# ---------------------------------------------------------------------------
def _conv_s1_kernel(x_ref, w_ref, b_ref, o_ref, *, kp, oh, ow):
    # x_ref: (bt, oh+kp-1, ow+kp-1, cin) bf16
    # w_ref: (kp*kp, cin, oc) bf16 (tap-major), resident
    # b_ref: (1, oc) f32, resident
    # o_ref: (bt, oh, ow, oc) bf16
    bt = x_ref.shape[0]
    cin = x_ref.shape[3]
    oc = w_ref.shape[2]
    acc = jnp.zeros((bt * oh * ow, oc), jnp.float32)
    for i in range(kp):
        for j in range(kp):
            tap = x_ref[:, i:i + oh, j:j + ow, :].reshape(bt * oh * ow, cin)
            acc = acc + jnp.dot(tap, w_ref[i * kp + j],
                                preferred_element_type=jnp.float32)
    acc = jnp.maximum(acc + b_ref[...], 0.0)
    o_ref[...] = acc.reshape(bt, oh, ow, oc).astype(o_ref.dtype)


def conv1_forward(x1, w1p, b1p, oh, ow, kp):
    batch, hs, ws, cin = x1.shape
    oc = w1p.shape[2]
    bt = _batch_tile(batch)
    grid = (pl.cdiv(batch, bt),)
    flops = 2 * batch * oh * ow * kp * kp * cin * oc
    bytes_accessed = (x1.size * 2 + w1p.size * 2 + b1p.size * 4
                      + batch * oh * ow * oc * 2)
    return pl.pallas_call(
        functools.partial(_conv_s1_kernel, kp=kp, oh=oh, ow=ow),
        out_shape=jax.ShapeDtypeStruct((batch, oh, ow, oc), jnp.bfloat16),
        grid=grid,
        in_specs=[
            pl.BlockSpec((bt, hs, ws, cin), lambda i: (i, 0, 0, 0)),
            pl.BlockSpec(w1p.shape, lambda i: (0, 0, 0)),   # weights resident
            pl.BlockSpec(b1p.shape, lambda i: (0, 0)),      # bias resident
        ],
        out_specs=pl.BlockSpec((bt, oh, ow, oc), lambda i: (i, 0, 0, 0)),
        compiler_params=pltpu.CompilerParams(
            dimension_semantics=("parallel",),
            vmem_limit_bytes=VMEM_LIMIT_BYTES),
        cost_estimate=pl.CostEstimate(flops=flops, transcendentals=0,
                                      bytes_accessed=bytes_accessed),
    )(x1, w1p, b1p)


# ---------------------------------------------------------------------------
# Kernel 2 (fused tail): conv2 -> ReLU -> conv3 -> ReLU -> fc1 -> ReLU -> fc2.
# All weights resident in VMEM; activations never leave the kernel.
# ---------------------------------------------------------------------------
def _tail_kernel(x_ref, w2_ref, b2_ref, w3_ref, b3_ref,
                 wf1_ref, bf1_ref, wf2_ref, bf2_ref, o_ref,
                 *, oh2, ow2, oh3, ow3, n_actions):
    bt = x_ref.shape[0]
    c2 = x_ref.shape[3]
    oc2 = w2_ref.shape[2]
    oc3 = w3_ref.shape[2]

    # conv2 (space-to-depth'd -> 2x2 kernel, stride 1) + ReLU
    acc2 = jnp.zeros((bt * oh2 * ow2, oc2), jnp.float32)
    for i in range(2):
        for j in range(2):
            tap = x_ref[:, i:i + oh2, j:j + ow2, :].reshape(bt * oh2 * ow2, c2)
            acc2 = acc2 + jnp.dot(tap, w2_ref[i * 2 + j],
                                  preferred_element_type=jnp.float32)
    h2 = jnp.maximum(acc2 + b2_ref[...], 0.0).astype(jnp.bfloat16)
    h2 = h2.reshape(bt, oh2, ow2, oc2)

    # conv3 (3x3, stride 1) + ReLU
    acc3 = jnp.zeros((bt * oh3 * ow3, oc3), jnp.float32)
    for i in range(3):
        for j in range(3):
            tap = h2[:, i:i + oh3, j:j + ow3, :].reshape(bt * oh3 * ow3, oc2)
            acc3 = acc3 + jnp.dot(tap, w3_ref[i * 3 + j],
                                  preferred_element_type=jnp.float32)
    h3 = jnp.maximum(acc3 + b3_ref[...], 0.0).astype(jnp.bfloat16)
    h3 = h3.reshape(bt, oh3, ow3, oc3)

    # fc1 as a sum over conv3 spatial positions (weights pre-permuted so this
    # matches PyTorch's NCHW flatten), then ReLU
    hid = jnp.zeros((bt, wf1_ref.shape[2]), jnp.float32)
    for p in range(oh3):
        for q in range(ow3):
            hid = hid + jnp.dot(h3[:, p, q, :], wf1_ref[p * ow3 + q],
                                preferred_element_type=jnp.float32)
    hid = jnp.maximum(hid + bf1_ref[...], 0.0).astype(jnp.bfloat16)

    # fc2 (N padded to 128 at prep time; slice back before the store)
    qv = jnp.dot(hid, wf2_ref[...], preferred_element_type=jnp.float32)
    qv = qv + bf2_ref[...]
    o_ref[...] = qv[:, :n_actions].astype(o_ref.dtype)


def tail_forward(x2, prep, oh2, ow2, oh3, ow3, n_actions):
    batch, hs, ws, c2 = x2.shape
    bt = _batch_tile(batch)
    grid = (pl.cdiv(batch, bt),)
    oc2 = prep["c2_w"].shape[2]
    oc3 = prep["c3_w"].shape[2]
    nh = prep["fc1_w"].shape[2]
    nap = prep["fc2_w"].shape[1]
    flops = 2 * batch * (oh2 * ow2 * 4 * c2 * oc2
                         + oh3 * ow3 * 9 * oc2 * oc3
                         + oh3 * ow3 * oc3 * nh
                         + nh * nap)
    bytes_accessed = (x2.size * 2
                      + sum(prep[k].size * 2 for k in ("c2_w", "c3_w", "fc1_w", "fc2_w"))
                      + sum(prep[k].size * 4 for k in ("c2_b", "c3_b", "fc1_b", "fc2_b"))
                      + batch * n_actions * 4)

    def weight_spec(a):
        return pl.BlockSpec(a.shape, lambda i: (0,) * a.ndim)

    return pl.pallas_call(
        functools.partial(_tail_kernel, oh2=oh2, ow2=ow2, oh3=oh3, ow3=ow3,
                          n_actions=n_actions),
        out_shape=jax.ShapeDtypeStruct((batch, n_actions), jnp.float32),
        grid=grid,
        in_specs=[
            pl.BlockSpec((bt, hs, ws, c2), lambda i: (i, 0, 0, 0)),
            weight_spec(prep["c2_w"]), weight_spec(prep["c2_b"]),
            weight_spec(prep["c3_w"]), weight_spec(prep["c3_b"]),
            weight_spec(prep["fc1_w"]), weight_spec(prep["fc1_b"]),
            weight_spec(prep["fc2_w"]), weight_spec(prep["fc2_b"]),
        ],
        out_specs=pl.BlockSpec((bt, n_actions), lambda i: (i, 0)),
        compiler_params=pltpu.CompilerParams(
            dimension_semantics=("parallel",),
            vmem_limit_bytes=VMEM_LIMIT_BYTES),
        cost_estimate=pl.CostEstimate(flops=flops, transcendentals=0,
                                      bytes_accessed=bytes_accessed),
    )(x2, prep["c2_w"], prep["c2_b"], prep["c3_w"], prep["c3_b"],
      prep["fc1_w"], prep["fc1_b"], prep["fc2_w"], prep["fc2_b"])


# ---------------------------------------------------------------------------
# XLA-side layout helper: crop + space-to-depth so a stride-s conv becomes a
# stride-1 conv.  Pure layout op on small tensors; channel order is (di, dj, c).
# TODO(synk): this inter-layer space-to-depth is left to XLA; it could be
# absorbed into the conv1 kernel's store layout if it ever shows in profiles.
# ---------------------------------------------------------------------------
def _space_to_depth(x, stride, kernel, oh, ow):
    b = x.shape[0]
    c = x.shape[3]
    cov_h = (oh - 1) * stride + kernel
    cov_w = (ow - 1) * stride + kernel
    x = x[:, :cov_h, :cov_w, :]
    hs, ws = cov_h // stride, cov_w // stride
    x = x.reshape(b, hs, stride, ws, stride, c)
    x = jnp.transpose(x, (0, 1, 3, 2, 4, 5))
    return x.reshape(b, hs, ws, stride * stride * c)


# ---------------------------------------------------------------------------
# Parameter init (PyTorch layouts) + one-time device-layout preparation.
# ---------------------------------------------------------------------------
def init_dqn_params(key, in_channels, n_actions, conv_output_size):
    def uinit(k, shape, fan_in):
        bound = 1.0 / jnp.sqrt(jnp.float32(fan_in))
        return jax.random.uniform(k, shape, jnp.float32, -bound, bound)

    ks = jax.random.split(key, 10)
    p = {}
    p["c1_w"] = uinit(ks[0], (32, in_channels, 8, 8), in_channels * 64)
    p["c1_b"] = uinit(ks[1], (32,), in_channels * 64)
    p["c2_w"] = uinit(ks[2], (64, 32, 4, 4), 32 * 16)
    p["c2_b"] = uinit(ks[3], (64,), 32 * 16)
    p["c3_w"] = uinit(ks[4], (64, 64, 3, 3), 64 * 9)
    p["c3_b"] = uinit(ks[5], (64,), 64 * 9)
    p["fc1_w"] = uinit(ks[6], (512, conv_output_size), conv_output_size)  # (out,in)
    p["fc1_b"] = uinit(ks[7], (512,), conv_output_size)
    p["fc2_w"] = uinit(ks[8], (n_actions, 512), 512)
    p["fc2_b"] = uinit(ks[9], (n_actions,), 512)
    return p


def _prep_conv(w, b, s2d):
    """(OC,C,KH,KW) PyTorch conv weight -> (taps, s2d*s2d*C, OC) bf16 for the
    equivalent stride-1 conv on space-to-depth'd input (channel order di,dj,c)."""
    oc, c, kh, kw = w.shape
    kp_h, kp_w = kh // s2d, kw // s2d
    wp = jnp.transpose(w, (2, 3, 1, 0))                 # (kh, kw, c, oc)
    wp = wp.reshape(kp_h, s2d, kp_w, s2d, c, oc)        # (i', di, j', dj, c, oc)
    wp = jnp.transpose(wp, (0, 2, 1, 3, 4, 5))          # (i', j', di, dj, c, oc)
    wp = wp.reshape(kp_h * kp_w, s2d * s2d * c, oc).astype(jnp.bfloat16)
    bp = b.reshape(1, oc).astype(jnp.float32)
    return wp, bp


def prepare_params(params, conv_out_chw):
    """Transpose / cast / pad all weights once, off the per-step critical path."""
    c3, h3, w3 = conv_out_chw
    prep = {}
    prep["c1_w"], prep["c1_b"] = _prep_conv(params["c1_w"], params["c1_b"], 4)
    prep["c2_w"], prep["c2_b"] = _prep_conv(params["c2_w"], params["c2_b"], 2)
    prep["c3_w"], prep["c3_b"] = _prep_conv(params["c3_w"], params["c3_b"], 1)

    # fc1: PyTorch flattens NCHW (c, p, q); store as (p*W3+q, c, 512) so the
    # kernel's per-spatial-position sum reproduces the same contraction.
    wf1 = params["fc1_w"].reshape(-1, c3, h3, w3)       # (512, c, p, q)
    wf1 = jnp.transpose(wf1, (2, 3, 1, 0)).reshape(h3 * w3, c3, -1)
    prep["fc1_w"] = wf1.astype(jnp.bfloat16)
    prep["fc1_b"] = params["fc1_b"].reshape(1, -1).astype(jnp.float32)

    na = params["fc2_w"].shape[0]
    nap = _round_up(max(na, 128), 128)
    prep["fc2_w"] = jnp.pad(params["fc2_w"].T,
                            ((0, 0), (0, nap - na))).astype(jnp.bfloat16)
    prep["fc2_b"] = jnp.pad(params["fc2_b"].reshape(1, na),
                            ((0, 0), (0, nap - na))).astype(jnp.float32)
    return prep


# ---------------------------------------------------------------------------
# Full DQN forward (input in PyTorch NCHW layout).
# ---------------------------------------------------------------------------
def dqn_forward(prep, x_nchw, n_actions, conv_dims):
    (oh1, ow1), (oh2, ow2), (oh3, ow3) = conv_dims
    x = jnp.transpose(x_nchw, (0, 2, 3, 1)).astype(jnp.bfloat16)  # NHWC once
    x1 = _space_to_depth(x, 4, 8, oh1, ow1)                       # conv1 input
    h1 = conv1_forward(x1, prep["c1_w"], prep["c1_b"], oh1, ow1, kp=2)
    x2 = _space_to_depth(h1, 2, 4, oh2, ow2)                      # conv2 input
    return tail_forward(x2, prep, oh2, ow2, oh3, ow3, n_actions)


# Pure-JAX f32 reference (exactly the PyTorch module's math), for validation.
def dqn_reference(params, x):
    dn = ("NCHW", "OIHW", "NCHW")
    h = jax.lax.conv_general_dilated(x, params["c1_w"], (4, 4), "VALID",
                                     dimension_numbers=dn)
    h = jax.nn.relu(h + params["c1_b"][None, :, None, None])
    h = jax.lax.conv_general_dilated(h, params["c2_w"], (2, 2), "VALID",
                                     dimension_numbers=dn)
    h = jax.nn.relu(h + params["c2_b"][None, :, None, None])
    h = jax.lax.conv_general_dilated(h, params["c3_w"], (1, 1), "VALID",
                                     dimension_numbers=dn)
    h = jax.nn.relu(h + params["c3_b"][None, :, None, None])
    h = h.reshape(x.shape[0], -1)
    h = jax.nn.relu(h @ params["fc1_w"].T + params["fc1_b"])
    return h @ params["fc2_w"].T + params["fc2_b"]


if __name__ == "__main__":
    # Smallest shapes consistent with the module's conv arithmetic:
    # 36x36 -> conv(k8,s4): 8x8 -> conv(k4,s2): 3x3 -> conv(k3,s1): 1x1
    B, C, H, W = 2, 4, 36, 36
    n_actions = 6

    def _out(h, k, s):
        return (h - k) // s + 1

    H1, W1 = _out(H, 8, 4), _out(W, 8, 4)
    H2, W2 = _out(H1, 4, 2), _out(W1, 4, 2)
    H3, W3 = _out(H2, 3, 1), _out(W2, 3, 1)
    conv_dims = ((H1, W1), (H2, W2), (H3, W3))
    conv_output_size = 64 * H3 * W3            # analytic _get_conv_output

    key = jax.random.PRNGKey(0)
    k_params, k_x = jax.random.split(key)
    params = init_dqn_params(k_params, C, n_actions, conv_output_size)
    prep = prepare_params(params, (64, H3, W3))          # one-time layout prep
    x = jax.random.normal(k_x, (B, C, H, W), dtype=jnp.float32)

    fwd = jax.jit(lambda p, xx: dqn_forward(p, xx, n_actions, conv_dims))
    q_values = fwd(prep, x)
    jax.block_until_ready(q_values)

    assert q_values.shape == (B, n_actions), q_values.shape
    q_ref = dqn_reference(params, x)
    err = float(jnp.max(jnp.abs(q_values - q_ref)))
    tol = 5e-2 * max(1.0, float(jnp.max(jnp.abs(q_ref))))
    assert err < tol, f"max abs error {err} exceeds tolerance {tol}"
    print("KERNEL_OK")
</pallas_src>

<mosaic_0001>
module attributes {stable_mosaic.version = 11 : i64} {
  func.func @_conv_s1_kernel(%arg0: i32, %arg1: memref<2x9x9x64xbf16, #tpu.memory_space<vmem>>, %arg2: memref<4x64x32xbf16, #tpu.memory_space<vmem>>, %arg3: memref<1x32xf32, #tpu.memory_space<vmem>>, %arg4: memref<2x8x8x32xbf16, #tpu.memory_space<vmem>>) attributes {dimension_semantics = [#tpu.dimension_semantics<parallel>], iteration_bounds = array<i64: 1>, scalar_prefetch = 0 : i64, scratch_operands = 0 : i64, tpu.core_type = #tpu.core_type<tc>, window_params = [{transform_indices = @transform_0, window_bounds = array<i64: 2, 9, 9, 64>}, {pipeline_mode = #tpu.pipeline_mode<synchronous>, transform_indices = @transform_1, window_bounds = array<i64: 4, 64, 32>}, {pipeline_mode = #tpu.pipeline_mode<synchronous>, transform_indices = @transform_2, window_bounds = array<i64: 1, 32>}, {transform_indices = @transform_3, window_bounds = array<i64: 2, 8, 8, 32>}]} {
    %cst = arith.constant 0.000000e+00 : f32
    %0 = vector.broadcast %cst : f32 to vector<128x32xf32>
    %c0 = arith.constant 0 : index
    %c0_0 = arith.constant 0 : index
    %c0_1 = arith.constant 0 : index
    %c0_2 = arith.constant 0 : index
    %1 = vector.load %arg1[%c0, %c0_0, %c0_1, %c0_2] : memref<2x9x9x64xbf16, #tpu.memory_space<vmem>>, vector<2x8x8x64xbf16>
    %2 = vector.shape_cast %1 : vector<2x8x8x64xbf16> to vector<128x64xbf16>
    %c0_3 = arith.constant 0 : index
    %c0_4 = arith.constant 0 : index
    %c0_5 = arith.constant 0 : index
    %3 = vector.load %arg2[%c0_3, %c0_4, %c0_5] : memref<4x64x32xbf16, #tpu.memory_space<vmem>>, vector<1x64x32xbf16>
    %4 = vector.shape_cast %3 : vector<1x64x32xbf16> to vector<64x32xbf16>
    %cst_6 = arith.constant dense<0.000000e+00> : vector<128x32xf32>
    %5 = tpu.matmul %2, %4, %cst_6 {dimension_numbers = #tpu.dot_dimension_numbers<[1], [0], [0], [1], [0, 0, 1, 1], [], []>} : vector<128x64xbf16>, vector<64x32xbf16>, vector<128x32xf32> -> vector<128x32xf32>
    %6 = arith.addf %0, %5 : vector<128x32xf32>
    %c0_7 = arith.constant 0 : index
    %c0_8 = arith.constant 0 : index
    %c1 = arith.constant 1 : index
    %c0_9 = arith.constant 0 : index
    %7 = vector.load %arg1[%c0_7, %c0_8, %c1, %c0_9] : memref<2x9x9x64xbf16, #tpu.memory_space<vmem>>, vector<2x8x8x64xbf16>
    %8 = vector.shape_cast %7 : vector<2x8x8x64xbf16> to vector<128x64xbf16>
    %c1_10 = arith.constant 1 : index
    %c0_11 = arith.constant 0 : index
    %c0_12 = arith.constant 0 : index
    %9 = vector.load %arg2[%c1_10, %c0_11, %c0_12] : memref<4x64x32xbf16, #tpu.memory_space<vmem>>, vector<1x64x32xbf16>
    %10 = vector.shape_cast %9 : vector<1x64x32xbf16> to vector<64x32xbf16>
    %cst_13 = arith.constant dense<0.000000e+00> : vector<128x32xf32>
    %11 = tpu.matmul %8, %10, %cst_13 {dimension_numbers = #tpu.dot_dimension_numbers<[1], [0], [0], [1], [0, 0, 1, 1], [], []>} : vector<128x64xbf16>, vector<64x32xbf16>, vector<128x32xf32> -> vector<128x32xf32>
    %12 = arith.addf %6, %11 : vector<128x32xf32>
    %c0_14 = arith.constant 0 : index
    %c1_15 = arith.constant 1 : index
    %c0_16 = arith.constant 0 : index
    %c0_17 = arith.constant 0 : index
    %13 = vector.load %arg1[%c0_14, %c1_15, %c0_16, %c0_17] : memref<2x9x9x64xbf16, #tpu.memory_space<vmem>>, vector<2x8x8x64xbf16>
    %14 = vector.shape_cast %13 : vector<2x8x8x64xbf16> to vector<128x64xbf16>
    %c2 = arith.constant 2 : index
    %c0_18 = arith.constant 0 : index
    %c0_19 = arith.constant 0 : index
    %15 = vector.load %arg2[%c2, %c0_18, %c0_19] : memref<4x64x32xbf16, #tpu.memory_space<vmem>>, vector<1x64x32xbf16>
    %16 = vector.shape_cast %15 : vector<1x64x32xbf16> to vector<64x32xbf16>
    %cst_20 = arith.constant dense<0.000000e+00> : vector<128x32xf32>
    %17 = tpu.matmul %14, %16, %cst_20 {dimension_numbers = #tpu.dot_dimension_numbers<[1], [0], [0], [1], [0, 0, 1, 1], [], []>} : vector<128x64xbf16>, vector<64x32xbf16>, vector<128x32xf32> -> vector<128x32xf32>
    %18 = arith.addf %12, %17 : vector<128x32xf32>
    %c0_21 = arith.constant 0 : index
    %c1_22 = arith.constant 1 : index
    %c1_23 = arith.constant 1 : index
    %c0_24 = arith.constant 0 : index
    %19 = vector.load %arg1[%c0_21, %c1_22, %c1_23, %c0_24] : memref<2x9x9x64xbf16, #tpu.memory_space<vmem>>, vector<2x8x8x64xbf16>
    %20 = vector.shape_cast %19 : vector<2x8x8x64xbf16> to vector<128x64xbf16>
    %c3 = arith.constant 3 : index
    %c0_25 = arith.constant 0 : index
    %c0_26 = arith.constant 0 : index
    %21 = vector.load %arg2[%c3, %c0_25, %c0_26] : memref<4x64x32xbf16, #tpu.memory_space<vmem>>, vector<1x64x32xbf16>
    %22 = vector.shape_cast %21 : vector<1x64x32xbf16> to vector<64x32xbf16>
    %cst_27 = arith.constant dense<0.000000e+00> : vector<128x32xf32>
    %23 = tpu.matmul %20, %22, %cst_27 {dimension_numbers = #tpu.dot_dimension_numbers<[1], [0], [0], [1], [0, 0, 1, 1], [], []>} : vector<128x64xbf16>, vector<64x32xbf16>, vector<128x32xf32> -> vector<128x32xf32>
    %24 = arith.addf %18, %23 : vector<128x32xf32>
    %c0_28 = arith.constant 0 : index
    %c0_29 = arith.constant 0 : index
    %25 = vector.load %arg3[%c0_28, %c0_29] : memref<1x32xf32, #tpu.memory_space<vmem>>, vector<1x32xf32>
    %26 = vector.broadcast %25 : vector<1x32xf32> to vector<128x32xf32>
    %27 = arith.addf %24, %26 : vector<128x32xf32>
    %cst_30 = arith.constant 0.000000e+00 : f32
    %28 = vector.broadcast %cst_30 : f32 to vector<128x32xf32>
    %29 = arith.maximumf %27, %28 : vector<128x32xf32>
    %30 = vector.shape_cast %29 : vector<128x32xf32> to vector<2x8x8x32xf32>
    %31 = arith.truncf %30 : vector<2x8x8x32xf32> to vector<2x8x8x32xbf16>
    %c0_31 = arith.constant 0 : index
    %c0_32 = arith.constant 0 : index
    %c0_33 = arith.constant 0 : index
    %c0_34 = arith.constant 0 : index
    %32 = vector.load %arg4[%c0_31, %c0_32, %c0_33, %c0_34] : memref<2x8x8x32xbf16, #tpu.memory_space<vmem>>, vector<2x8x8x32xbf16>
    tpu.vector_store %arg4[%c0_31, %c0_32, %c0_33, %c0_34], %31 {strides = array<i32>} : memref<2x8x8x32xbf16, #tpu.memory_space<vmem>>, vector<2x8x8x32xbf16>,
    return
  }
  func.func @transform_0(%arg0: i32) -> (i32, i32, i32, i32) {
    %c0_i32 = arith.constant 0 : i32
    %c0_i32_0 = arith.constant 0 : i32
    %c0_i32_1 = arith.constant 0 : i32
    %c0_i32_2 = arith.constant 0 : i32
    return %arg0, %c0_i32, %c0_i32_0, %c0_i32_1 : i32, i32, i32, i32
  }
  func.func @transform_1(%arg0: i32) -> (i32, i32, i32) {
    %c0_i32 = arith.constant 0 : i32
    %c0_i32_0 = arith.constant 0 : i32
    %c0_i32_1 = arith.constant 0 : i32
    %c0_i32_2 = arith.constant 0 : i32
    return %c0_i32, %c0_i32_0, %c0_i32_1 : i32, i32, i32
  }
  func.func @transform_2(%arg0: i32) -> (i32, i32) {
    %c0_i32 = arith.constant 0 : i32
    %c0_i32_0 = arith.constant 0 : i32
    %c0_i32_1 = arith.constant 0 : i32
    return %c0_i32, %c0_i32_0 : i32, i32
  }
  func.func @transform_3(%arg0: i32) -> (i32, i32, i32, i32) {
    %c0_i32 = arith.constant 0 : i32
    %c0_i32_0 = arith.constant 0 : i32
    %c0_i32_1 = arith.constant 0 : i32
    %c0_i32_2 = arith.constant 0 : i32
    return %arg0, %c0_i32, %c0_i32_0, %c0_i32_1 : i32, i32, i32, i32
  }
}

module attributes {stable_mosaic.version = 11 : i64} {
  func.func @_tail_kernel(%arg0: i32, %arg1: memref<2x4x4x128xbf16, #tpu.memory_space<vmem>>, %arg2: memref<4x128x64xbf16, #tpu.memory_space<vmem>>, %arg3: memref<1x64xf32, #tpu.memory_space<vmem>>, %arg4: memref<9x64x64xbf16, #tpu.memory_space<vmem>>, %arg5: memref<1x64xf32, #tpu.memory_space<vmem>>, %arg6: memref<1x64x512xbf16, #tpu.memory_space<vmem>>, %arg7: memref<1x512xf32, #tpu.memory_space<vmem>>, %arg8: memref<512x128xbf16, #tpu.memory_space<vmem>>, %arg9: memref<1x128xf32, #tpu.memory_space<vmem>>, %arg10: memref<2x6xf32, #tpu.memory_space<vmem>>) attributes {dimension_semantics = [#tpu.dimension_semantics<parallel>], iteration_bounds = array<i64: 1>, scalar_prefetch = 0 : i64, scratch_operands = 0 : i64, tpu.core_type = #tpu.core_type<tc>, window_params = [{transform_indices = @transform_0, window_bounds = array<i64: 2, 4, 4, 128>}, {pipeline_mode = #tpu.pipeline_mode<synchronous>, transform_indices = @transform_1, window_bounds = array<i64: 4, 128, 64>}, {pipeline_mode = #tpu.pipeline_mode<synchronous>, transform_indices = @transform_2, window_bounds = array<i64: 1, 64>}, {pipeline_mode = #tpu.pipeline_mode<synchronous>, transform_indices = @transform_3, window_bounds = array<i64: 9, 64, 64>}, {pipeline_mode = #tpu.pipeline_mode<synchronous>, transform_indices = @transform_4, window_bounds = array<i64: 1, 64>}, {pipeline_mode = #tpu.pipeline_mode<synchronous>, transform_indices = @transform_5, window_bounds = array<i64: 1, 64, 512>}, {pipeline_mode = #tpu.pipeline_mode<synchronous>, transform_indices = @transform_6, window_bounds = array<i64: 1, 512>}, {pipeline_mode = #tpu.pipeline_mode<synchronous>, transform_indices = @transform_7, window_bounds = array<i64: 512, 128>}, {pipeline_mode = #tpu.pipeline_mode<synchronous>, transform_indices = @transform_8, window_bounds = array<i64: 1, 128>}, {transform_indices = @transform_9, window_bounds = array<i64: 2, 6>}]} {
    %cst = arith.constant 0.000000e+00 : f32
    %0 = vector.broadcast %cst : f32 to vector<18x64xf32>
    %c0 = arith.constant 0 : index
    %c0_0 = arith.constant 0 : index
    %c0_1 = arith.constant 0 : index
    %c0_2 = arith.constant 0 : index
    %1 = vector.load %arg1[%c0, %c0_0, %c0_1, %c0_2] : memref<2x4x4x128xbf16, #tpu.memory_space<vmem>>, vector<2x3x3x128xbf16>
    %2 = vector.shape_cast %1 : vector<2x3x3x128xbf16> to vector<18x128xbf16>
    %c0_3 = arith.constant 0 : index
    %c0_4 = arith.constant 0 : index
    %c0_5 = arith.constant 0 : index
    %3 = vector.load %arg2[%c0_3, %c0_4, %c0_5] : memref<4x128x64xbf16, #tpu.memory_space<vmem>>, vector<1x128x64xbf16>
    %4 = vector.shape_cast %3 : vector<1x128x64xbf16> to vector<128x64xbf16>
    %cst_6 = arith.constant dense<0.000000e+00> : vector<18x64xf32>
    %5 = tpu.matmul %2, %4, %cst_6 {dimension_numbers = #tpu.dot_dimension_numbers<[1], [0], [0], [1], [0, 0, 1, 1], [], []>} : vector<18x128xbf16>, vector<128x64xbf16>, vector<18x64xf32> -> vector<18x64xf32>
    %6 = arith.addf %0, %5 : vector<18x64xf32>
    %c0_7 = arith.constant 0 : index
    %c0_8 = arith.constant 0 : index
    %c1 = arith.constant 1 : index
    %c0_9 = arith.constant 0 : index
    %7 = vector.load %arg1[%c0_7, %c0_8, %c1, %c0_9] : memref<2x4x4x128xbf16, #tpu.memory_space<vmem>>, vector<2x3x3x128xbf16>
    %8 = vector.shape_cast %7 : vector<2x3x3x128xbf16> to vector<18x128xbf16>
    %c1_10 = arith.constant 1 : index
    %c0_11 = arith.constant 0 : index
    %c0_12 = arith.constant 0 : index
    %9 = vector.load %arg2[%c1_10, %c0_11, %c0_12] : memref<4x128x64xbf16, #tpu.memory_space<vmem>>, vector<1x128x64xbf16>
    %10 = vector.shape_cast %9 : vector<1x128x64xbf16> to vector<128x64xbf16>
    %cst_13 = arith.constant dense<0.000000e+00> : vector<18x64xf32>
    %11 = tpu.matmul %8, %10, %cst_13 {dimension_numbers = #tpu.dot_dimension_numbers<[1], [0], [0], [1], [0, 0, 1, 1], [], []>} : vector<18x128xbf16>, vector<128x64xbf16>, vector<18x64xf32> -> vector<18x64xf32>
    %12 = arith.addf %6, %11 : vector<18x64xf32>
    %c0_14 = arith.constant 0 : index
    %c1_15 = arith.constant 1 : index
    %c0_16 = arith.constant 0 : index
    %c0_17 = arith.constant 0 : index
    %13 = vector.load %arg1[%c0_14, %c1_15, %c0_16, %c0_17] : memref<2x4x4x128xbf16, #tpu.memory_space<vmem>>, vector<2x3x3x128xbf16>
    %14 = vector.shape_cast %13 : vector<2x3x3x128xbf16> to vector<18x128xbf16>
    %c2 = arith.constant 2 : index
    %c0_18 = arith.constant 0 : index
    %c0_19 = arith.constant 0 : index
    %15 = vector.load %arg2[%c2, %c0_18, %c0_19] : memref<4x128x64xbf16, #tpu.memory_space<vmem>>, vector<1x128x64xbf16>
    %16 = vector.shape_cast %15 : vector<1x128x64xbf16> to vector<128x64xbf16>
    %cst_20 = arith.constant dense<0.000000e+00> : vector<18x64xf32>
    %17 = tpu.matmul %14, %16, %cst_20 {dimension_numbers = #tpu.dot_dimension_numbers<[1], [0], [0], [1], [0, 0, 1, 1], [], []>} : vector<18x128xbf16>, vector<128x64xbf16>, vector<18x64xf32> -> vector<18x64xf32>
    %18 = arith.addf %12, %17 : vector<18x64xf32>
    %c0_21 = arith.constant 0 : index
    %c1_22 = arith.constant 1 : index
    %c1_23 = arith.constant 1 : index
    %c0_24 = arith.constant 0 : index
    %19 = vector.load %arg1[%c0_21, %c1_22, %c1_23, %c0_24] : memref<2x4x4x128xbf16, #tpu.memory_space<vmem>>, vector<2x3x3x128xbf16>
    %20 = vector.shape_cast %19 : vector<2x3x3x128xbf16> to vector<18x128xbf16>
    %c3 = arith.constant 3 : index
    %c0_25 = arith.constant 0 : index
    %c0_26 = arith.constant 0 : index
    %21 = vector.load %arg2[%c3, %c0_25, %c0_26] : memref<4x128x64xbf16, #tpu.memory_space<vmem>>, vector<1x128x64xbf16>
    %22 = vector.shape_cast %21 : vector<1x128x64xbf16> to vector<128x64xbf16>
    %cst_27 = arith.constant dense<0.000000e+00> : vector<18x64xf32>
    %23 = tpu.matmul %20, %22, %cst_27 {dimension_numbers = #tpu.dot_dimension_numbers<[1], [0], [0], [1], [0, 0, 1, 1], [], []>} : vector<18x128xbf16>, vector<128x64xbf16>, vector<18x64xf32> -> vector<18x64xf32>
    %24 = arith.addf %18, %23 : vector<18x64xf32>
    %c0_28 = arith.constant 0 : index
    %c0_29 = arith.constant 0 : index
    %25 = vector.load %arg3[%c0_28, %c0_29] : memref<1x64xf32, #tpu.memory_space<vmem>>, vector<1x64xf32>
    %26 = vector.broadcast %25 : vector<1x64xf32> to vector<18x64xf32>
    %27 = arith.addf %24, %26 : vector<18x64xf32>
    %cst_30 = arith.constant 0.000000e+00 : f32
    %28 = vector.broadcast %cst_30 : f32 to vector<18x64xf32>
    %29 = arith.maximumf %27, %28 : vector<18x64xf32>
    %30 = arith.truncf %29 : vector<18x64xf32> to vector<18x64xbf16>
    %31 = vector.shape_cast %30 : vector<18x64xbf16> to vector<2x3x3x64xbf16>
    %cst_31 = arith.constant 0.000000e+00 : f32
    %32 = vector.broadcast %cst_31 : f32 to vector<2x64xf32>
    %33 = vector.extract_strided_slice %31 {offsets = [0, 0, 0, 0], sizes = [2, 1, 1, 64], strides = [1, 1, 1, 1]} : vector<2x3x3x64xbf16> to vector<2x1x1x64xbf16>
    %34 = vector.shape_cast %33 : vector<2x1x1x64xbf16> to vector<2x64xbf16>
    %c0_32 = arith.constant 0 : index
    %c0_33 = arith.constant 0 : index
    %c0_34 = arith.constant 0 : index
    %35 = vector.load %arg4[%c0_32, %c0_33, %c0_34] : memref<9x64x64xbf16, #tpu.memory_space<vmem>>, vector<1x64x64xbf16>
    %36 = vector.shape_cast %35 : vector<1x64x64xbf16> to vector<64x64xbf16>
    %cst_35 = arith.constant dense<0.000000e+00> : vector<2x64xf32>
    %37 = tpu.matmul %34, %36, %cst_35 {dimension_numbers = #tpu.dot_dimension_numbers<[1], [0], [0], [1], [0, 0, 1, 1], [], []>} : vector<2x64xbf16>, vector<64x64xbf16>, vector<2x64xf32> -> vector<2x64xf32>
    %38 = arith.addf %32, %37 : vector<2x64xf32>
    %39 = vector.extract_strided_slice %31 {offsets = [0, 0, 1, 0], sizes = [2, 1, 1, 64], strides = [1, 1, 1, 1]} : vector<2x3x3x64xbf16> to vector<2x1x1x64xbf16>
    %40 = vector.shape_cast %39 : vector<2x1x1x64xbf16> to vector<2x64xbf16>
    %c1_36 = arith.constant 1 : index
    %c0_37 = arith.constant 0 : index
    %c0_38 = arith.constant 0 : index
    %41 = vector.load %arg4[%c1_36, %c0_37, %c0_38] : memref<9x64x64xbf16, #tpu.memory_space<vmem>>, vector<1x64x64xbf16>
    %42 = vector.shape_cast %41 : vector<1x64x64xbf16> to vector<64x64xbf16>
    %cst_39 = arith.constant dense<0.000000e+00> : vector<2x64xf32>
    %43 = tpu.matmul %40, %42, %cst_39 {dimension_numbers = #tpu.dot_dimension_numbers<[1], [0], [0], [1], [0, 0, 1, 1], [], []>} : vector<2x64xbf16>, vector<64x64xbf16>, vector<2x64xf32> -> vector<2x64xf32>
    %44 = arith.addf %38, %43 : vector<2x64xf32>
    %45 = vector.extract_strided_slice %31 {offsets = [0, 0, 2, 0], sizes = [2, 1, 1, 64], strides = [1, 1, 1, 1]} : vector<2x3x3x64xbf16> to vector<2x1x1x64xbf16>
    %46 = vector.shape_cast %45 : vector<2x1x1x64xbf16> to vector<2x64xbf16>
    %c2_40 = arith.constant 2 : index
    %c0_41 = arith.constant 0 : index
    %c0_42 = arith.constant 0 : index
    %47 = vector.load %arg4[%c2_40, %c0_41, %c0_42] : memref<9x64x64xbf16, #tpu.memory_space<vmem>>, vector<1x64x64xbf16>
    %48 = vector.shape_cast %47 : vector<1x64x64xbf16> to vector<64x64xbf16>
    %cst_43 = arith.constant dense<0.000000e+00> : vector<2x64xf32>
    %49 = tpu.matmul %46, %48, %cst_43 {dimension_numbers = #tpu.dot_dimension_numbers<[1], [0], [0], [1], [0, 0, 1, 1], [], []>} : vector<2x64xbf16>, vector<64x64xbf16>, vector<2x64xf32> -> vector<2x64xf32>
    %50 = arith.addf %44, %49 : vector<2x64xf32>
    %51 = vector.extract_strided_slice %31 {offsets = [0, 1, 0, 0], sizes = [2, 1, 1, 64], strides = [1, 1, 1, 1]} : vector<2x3x3x64xbf16> to vector<2x1x1x64xbf16>
    %52 = vector.shape_cast %51 : vector<2x1x1x64xbf16> to vector<2x64xbf16>
    %c3_44 = arith.constant 3 : index
    %c0_45 = arith.constant 0 : index
    %c0_46 = arith.constant 0 : index
    %53 = vector.load %arg4[%c3_44, %c0_45, %c0_46] : memref<9x64x64xbf16, #tpu.memory_space<vmem>>, vector<1x64x64xbf16>
    %54 = vector.shape_cast %53 : vector<1x64x64xbf16> to vector<64x64xbf16>
    %cst_47 = arith.constant dense<0.000000e+00> : vector<2x64xf32>
    %55 = tpu.matmul %52, %54, %cst_47 {dimension_numbers = #tpu.dot_dimension_numbers<[1], [0], [0], [1], [0, 0, 1, 1], [], []>} : vector<2x64xbf16>, vector<64x64xbf16>, vector<2x64xf32> -> vector<2x64xf32>
    %56 = arith.addf %50, %55 : vector<2x64xf32>
    %57 = vector.extract_strided_slice %31 {offsets = [0, 1, 1, 0], sizes = [2, 1, 1, 64], strides = [1, 1, 1, 1]} : vector<2x3x3x64xbf16> to vector<2x1x1x64xbf16>
    %58 = vector.shape_cast %57 : vector<2x1x1x64xbf16> to vector<2x64xbf16>
    %c4 = arith.constant 4 : index
    %c0_48 = arith.constant 0 : index
    %c0_49 = arith.constant 0 : index
    %59 = vector.load %arg4[%c4, %c0_48, %c0_49] : memref<9x64x64xbf16, #tpu.memory_space<vmem>>, vector<1x64x64xbf16>
    %60 = vector.shape_cast %59 : vector<1x64x64xbf16> to vector<64x64xbf16>
    %cst_50 = arith.constant dense<0.000000e+00> : vector<2x64xf32>
    %61 = tpu.matmul %58, %60, %cst_50 {dimension_numbers = #tpu.dot_dimension_numbers<[1], [0], [0], [1], [0, 0, 1, 1], [], []>} : vector<2x64xbf16>, vector<64x64xbf16>, vector<2x64xf32> -> vector<2x64xf32>
    %62 = arith.addf %56, %61 : vector<2x64xf32>
    %63 = vector.extract_strided_slice %31 {offsets = [0, 1, 2, 0], sizes = [2, 1, 1, 64], strides = [1, 1, 1, 1]} : vector<2x3x3x64xbf16> to vector<2x1x1x64xbf16>
    %64 = vector.shape_cast %63 : vector<2x1x1x64xbf16> to vector<2x64xbf16>
    %c5 = arith.constant 5 : index
    %c0_51 = arith.constant 0 : index
    %c0_52 = arith.constant 0 : index
    %65 = vector.load %arg4[%c5, %c0_51, %c0_52] : memref<9x64x64xbf16, #tpu.memory_space<vmem>>, vector<1x64x64xbf16>
    %66 = vector.shape_cast %65 : vector<1x64x64xbf16> to vector<64x64xbf16>
    %cst_53 = arith.constant dense<0.000000e+00> : vector<2x64xf32>
    %67 = tpu.matmul %64, %66, %cst_53 {dimension_numbers = #tpu.dot_dimension_numbers<[1], [0], [0], [1], [0, 0, 1, 1], [], []>} : vector<2x64xbf16>, vector<64x64xbf16>, vector<2x64xf32> -> vector<2x64xf32>
    %68 = arith.addf %62, %67 : vector<2x64xf32>
    %69 = vector.extract_strided_slice %31 {offsets = [0, 2, 0, 0], sizes = [2, 1, 1, 64], strides = [1, 1, 1, 1]} : vector<2x3x3x64xbf16> to vector<2x1x1x64xbf16>
    %70 = vector.shape_cast %69 : vector<2x1x1x64xbf16> to vector<2x64xbf16>
    %c6 = arith.constant 6 : index
    %c0_54 = arith.constant 0 : index
    %c0_55 = arith.constant 0 : index
    %71 = vector.load %arg4[%c6, %c0_54, %c0_55] : memref<9x64x64xbf16, #tpu.memory_space<vmem>>, vector<1x64x64xbf16>
    %72 = vector.shape_cast %71 : vector<1x64x64xbf16> to vector<64x64xbf16>
    %cst_56 = arith.constant dense<0.000000e+00> : vector<2x64xf32>
    %73 = tpu.matmul %70, %72, %cst_56 {dimension_numbers = #tpu.dot_dimension_numbers<[1], [0], [0], [1], [0, 0, 1, 1], [], []>} : vector<2x64xbf16>, vector<64x64xbf16>, vector<2x64xf32> -> vector<2x64xf32>
    %74 = arith.addf %68, %73 : vector<2x64xf32>
    %75 = vector.extract_strided_slice %31 {offsets = [0, 2, 1, 0], sizes = [2, 1, 1, 64], strides = [1, 1, 1, 1]} : vector<2x3x3x64xbf16> to vector<2x1x1x64xbf16>
    %76 = vector.shape_cast %75 : vector<2x1x1x64xbf16> to vector<2x64xbf16>
    %c7 = arith.constant 7 : index
    %c0_57 = arith.constant 0 : index
    %c0_58 = arith.constant 0 : index
    %77 = vector.load %arg4[%c7, %c0_57, %c0_58] : memref<9x64x64xbf16, #tpu.memory_space<vmem>>, vector<1x64x64xbf16>
    %78 = vector.shape_cast %77 : vector<1x64x64xbf16> to vector<64x64xbf16>
    %cst_59 = arith.constant dense<0.000000e+00> : vector<2x64xf32>
    %79 = tpu.matmul %76, %78, %cst_59 {dimension_numbers = #tpu.dot_dimension_numbers<[1], [0], [0], [1], [0, 0, 1, 1], [], []>} : vector<2x64xbf16>, vector<64x64xbf16>, vector<2x64xf32> -> vector<2x64xf32>
    %80 = arith.addf %74, %79 : vector<2x64xf32>
    %81 = vector.extract_strided_slice %31 {offsets = [0, 2, 2, 0], sizes = [2, 1, 1, 64], strides = [1, 1, 1, 1]} : vector<2x3x3x64xbf16> to vector<2x1x1x64xbf16>
    %82 = vector.shape_cast %81 : vector<2x1x1x64xbf16> to vector<2x64xbf16>
    %c8 = arith.constant 8 : index
    %c0_60 = arith.constant 0 : index
    %c0_61 = arith.constant 0 : index
    %83 = vector.load %arg4[%c8, %c0_60, %c0_61] : memref<9x64x64xbf16, #tpu.memory_space<vmem>>, vector<1x64x64xbf16>
    %84 = vector.shape_cast %83 : vector<1x64x64xbf16> to vector<64x64xbf16>
    %cst_62 = arith.constant dense<0.000000e+00> : vector<2x64xf32>
    %85 = tpu.matmul %82, %84, %cst_62 {dimension_numbers = #tpu.dot_dimension_numbers<[1], [0], [0], [1], [0, 0, 1, 1], [], []>} : vector<2x64xbf16>, vector<64x64xbf16>, vector<2x64xf32> -> vector<2x64xf32>
    %86 = arith.addf %80, %85 : vector<2x64xf32>
    %c0_63 = arith.constant 0 : index
    %c0_64 = arith.constant 0 : index
    %87 = vector.load %arg5[%c0_63, %c0_64] : memref<1x64xf32, #tpu.memory_space<vmem>>, vector<1x64xf32>
    %88 = vector.broadcast %87 : vector<1x64xf32> to vector<2x64xf32>
    %89 = arith.addf %86, %88 : vector<2x64xf32>
    %cst_65 = arith.constant 0.000000e+00 : f32
    %90 = vector.broadcast %cst_65 : f32 to vector<2x64xf32>
    %91 = arith.maximumf %89, %90 : vector<2x64xf32>
    %92 = arith.truncf %91 : vector<2x64xf32> to vector<2x64xbf16>
    %93 = vector.shape_cast %92 : vector<2x64xbf16> to vector<2x1x1x64xbf16>
    %cst_66 = arith.constant 0.000000e+00 : f32
    %94 = vector.broadcast %cst_66 : f32 to vector<2x512xf32>
    %95 = vector.shape_cast %93 : vector<2x1x1x64xbf16> to vector<2x64xbf16>
    %c0_67 = arith.constant 0 : index
    %c0_68 = arith.constant 0 : index
    %c0_69 = arith.constant 0 : index
    %96 = vector.load %arg6[%c0_67, %c0_68, %c0_69] : memref<1x64x512xbf16, #tpu.memory_space<vmem>>, vector<1x64x512xbf16>
    %97 = vector.shape_cast %96 : vector<1x64x512xbf16> to vector<64x512xbf16>
    %cst_70 = arith.constant dense<0.000000e+00> : vector<2x512xf32>
    %98 = tpu.matmul %95, %97, %cst_70 {dimension_numbers = #tpu.dot_dimension_numbers<[1], [0], [0], [1], [0, 0, 1, 1], [], []>} : vector<2x64xbf16>, vector<64x512xbf16>, vector<2x512xf32> -> vector<2x512xf32>
    %99 = arith.addf %94, %98 : vector<2x512xf32>
    %c0_71 = arith.constant 0 : index
    %c0_72 = arith.constant 0 : index
    %100 = vector.load %arg7[%c0_71, %c0_72] : memref<1x512xf32, #tpu.memory_space<vmem>>, vector<1x512xf32>
    %101 = vector.broadcast %100 : vector<1x512xf32> to vector<2x512xf32>
    %102 = arith.addf %99, %101 : vector<2x512xf32>
    %cst_73 = arith.constant 0.000000e+00 : f32
    %103 = vector.broadcast %cst_73 : f32 to vector<2x512xf32>
    %104 = arith.maximumf %102, %103 : vector<2x512xf32>
    %105 = arith.truncf %104 : vector<2x512xf32> to vector<2x512xbf16>
    %c0_74 = arith.constant 0 : index
    %c0_75 = arith.constant 0 : index
    %106 = vector.load %arg8[%c0_74, %c0_75] : memref<512x128xbf16, #tpu.memory_space<vmem>>, vector<512x128xbf16>
    %cst_76 = arith.constant dense<0.000000e+00> : vector<2x128xf32>
    %107 = tpu.matmul %105, %106, %cst_76 {dimension_numbers = #tpu.dot_dimension_numbers<[1], [0], [0], [1], [0, 0, 1, 1], [], []>} : vector<2x512xbf16>, vector<512x128xbf16>, vector<2x128xf32> -> vector<2x128xf32>
    %c0_77 = arith.constant 0 : index
    %c0_78 = arith.constant 0 : index
    %108 = vector.load %arg9[%c0_77, %c0_78] : memref<1x128xf32, #tpu.memory_space<vmem>>, vector<1x128xf32>
    %109 = vector.broadcast %108 : vector<1x128xf32> to vector<2x128xf32>
    %110 = arith.addf %107, %109 : vector<2x128xf32>
    %111 = vector.extract_strided_slice %110 {offsets = [0, 0], sizes = [2, 6], strides = [1, 1]} : vector<2x128xf32> to vector<2x6xf32>
    %c0_79 = arith.constant 0 : index
    %c0_80 = arith.constant 0 : index
    %112 = vector.load %arg10[%c0_79, %c0_80] : memref<2x6xf32, #tpu.memory_space<vmem>>, vector<2x6xf32>
    tpu.vector_store %arg10[%c0_79, %c0_80], %111 {strides = array<i32>} : memref<2x6xf32, #tpu.memory_space<vmem>>, vector<2x6xf32>,
    return
  }
  func.func @transform_0(%arg0: i32) -> (i32, i32, i32, i32) {
    %c0_i32 = arith.constant 0 : i32
    %c0_i32_0 = arith.constant 0 : i32
    %c0_i32_1 = arith.constant 0 : i32
    %c0_i32_2 = arith.constant 0 : i32
    return %arg0, %c0_i32, %c0_i32_0, %c0_i32_1 : i32, i32, i32, i32
  }
  func.func @transform_1(%arg0: i32) -> (i32, i32, i32) {
    %c0_i32 = arith.constant 0 : i32
    %c0_i32_0 = arith.constant 0 : i32
    %c0_i32_1 = arith.constant 0 : i32
    %c0_i32_2 = arith.constant 0 : i32
    return %c0_i32, %c0_i32_0, %c0_i32_1 : i32, i32, i32
  }
  func.func @transform_2(%arg0: i32) -> (i32, i32) {
    %c0_i32 = arith.constant 0 : i32
    %c0_i32_0 = arith.constant 0 : i32
    %c0_i32_1 = arith.constant 0 : i32
    return %c0_i32, %c0_i32_0 : i32, i32
  }
  func.func @transform_3(%arg0: i32) -> (i32, i32, i32) {
    %c0_i32 = arith.constant 0 : i32
    %c0_i32_0 = arith.constant 0 : i32
    %c0_i32_1 = arith.constant 0 : i32
    %c0_i32_2 = arith.constant 0 : i32
    return %c0_i32, %c0_i32_0, %c0_i32_1 : i32, i32, i32
  }
  func.func @transform_4(%arg0: i32) -> (i32, i32) {
    %c0_i32 = arith.constant 0 : i32
    %c0_i32_0 = arith.constant 0 : i32
    %c0_i32_1 = arith.constant 0 : i32
    return %c0_i32, %c0_i32_0 : i32, i32
  }
  func.func @transform_5(%arg0: i32) -> (i32, i32, i32) {
    %c0_i32 = arith.constant 0 : i32
    %c0_i32_0 = arith.constant 0 : i32
    %c0_i32_1 = arith.constant 0 : i32
    %c0_i32_2 = arith.constant 0 : i32
    return %c0_i32, %c0_i32_0, %c0_i32_1 : i32, i32, i32
  }
  func.func @transform_6(%arg0: i32) -> (i32, i32) {
    %c0_i32 = arith.constant 0 : i32
    %c0_i32_0 = arith.constant 0 : i32
    %c0_i32_1 = arith.constant 0 : i32
    return %c0_i32, %c0_i32_0 : i32, i32
  }
  func.func @transform_7(%arg0: i32) -> (i32, i32) {
    %c0_i32 = arith.constant 0 : i32
    %c0_i32_0 = arith.constant 0 : i32
    %c0_i32_1 = arith.constant 0 : i32
    return %c0_i32, %c0_i32_0 : i32, i32
  }
  func.func @transform_8(%arg0: i32) -> (i32, i32) {
    %c0_i32 = arith.constant 0 : i32
    %c0_i32_0 = arith.constant 0 : i32
    %c0_i32_1 = arith.constant 0 : i32
    return %c0_i32, %c0_i32_0 : i32, i32
  }
  func.func @transform_9(%arg0: i32) -> (i32, i32) {
    %c0_i32 = arith.constant 0 : i32
    %c0_i32_0 = arith.constant 0 : i32
    return %arg0, %c0_i32 : i32, i32
  }
}

</mosaic_0001>

<llo_original>
// kernel: _lambda_.2
$region0: #{_lambda_.2}
  #allocation0 [shape = 'u32[]', space=smem, size = 0x4, offset = 0x4, fixed_abs, tag = 'smem constant byte address 0x4 - core index']
  #allocation1 [shape = 'u32[72,128]{1,0:T(1,128)}', space=vmem, size = 0x9000, scoped, tag = 'internal scratch']
  %s0 = inlined_call_operand.vmem [shape: bf16[2,9,9,64], index: 0, kind: input, shape index: {}]
  %s1 = inlined_call_operand.vmem [shape: bf16[4,64,32], index: 1, kind: input, shape index: {}]
  %s2 = inlined_call_operand.vmem [shape: f32[1,32], index: 2, kind: input, shape index: {}]
  %s3 = inlined_call_operand.vmem [shape: bf16[2,8,8,32], index: 3, kind: output, shape index: {}]
  %s4 = sld [smem:[#allocation0]]
  $region22: #{_lambda_.2} parent=0
    _
  %s6 = ssub.s32 1, %s4
  %s7 = scalar_select 0, %s6, %s4
  // Predicated region
  $region2: #{_lambda_.2} parent=0 // pred_check
    _
  $region3: #{_lambda_.2} parent=0 // pred_check_branch
    %9 = sbr.rel (0) target = $region5
  $region4: #{_lambda_.2} parent=0 // pred_region
    _
  $region5: #{_lambda_.2} parent=0 // pred_fallthru
    _
  // Predicated region
  $region6: #{_lambda_.2} parent=0 // pred_check
    _
  $region7: #{_lambda_.2} parent=0 // pred_check_branch
    %11 = sbr.rel (0) target = $region9
  $region8: #{_lambda_.2} parent=0 // pred_region
    _
  $region9: #{_lambda_.2} parent=0 // pred_fallthru
    _
  // Predicated region
  $region10: #{_lambda_.2} parent=0 // pred_check
    _
  $region11: #{_lambda_.2} parent=0 // pred_check_branch
    %13 = sbr.rel (0) target = $region13
  $region12: #{_lambda_.2} parent=0 // pred_region
    _
  $region13: #{_lambda_.2} parent=0 // pred_fallthru
    _
  %v15 = vld [vmem:[%s0] sm:$0xf]
  %v16 = vld [vmem:[%s0 + $0x8] sm:$0xf]
  %v17 = vld [vmem:[%s0 + $0x10] sm:$0xf]
  %v18 = vld [vmem:[%s0 + $0x18] sm:$0xf]
  %v19 = vld [vmem:[%s0 + $0x20] sm:$0xf]
  %v20 = vld [vmem:[%s0 + $0x28] sm:$0xf]
  %v21 = vld [vmem:[%s0 + $0x30] sm:$0xf]
  %v22 = vld [vmem:[%s0 + $0x38] sm:$0xf]
  %v23 = vld [vmem:[%s0 + $0x48] sm:$0xf]
  %v24 = vld [vmem:[%s0 + $0x50] sm:$0xf]
  %v25 = vld [vmem:[%s0 + $0x58] sm:$0xf]
  %v26 = vld [vmem:[%s0 + $0x60] sm:$0xf]
  %v27 = vld [vmem:[%s0 + $0x68] sm:$0xf]
  %v28 = vld [vmem:[%s0 + $0x70] sm:$0xf]
  %v29 = vld [vmem:[%s0 + $0x78] sm:$0xf]
  %v30 = vld [vmem:[%s0 + $0x80] sm:$0xf]
  %v31 = vld [vmem:[%s1] sm:$0xf]
  %v32 = vld [vmem:[%s1 + $0x4] sm:$0xf]
  %v33 = vld [vmem:[%s1 + $0x8] sm:$0xf]
  %v34 = vld [vmem:[%s1 + $0xc] sm:$0xf]
  %v35 = vld [vmem:[%s1 + $0x10] sm:$0xf]
  %v36 = vld [vmem:[%s1 + $0x14] sm:$0xf]
  %v37 = vld [vmem:[%s1 + $0x18] sm:$0xf]
  %v38 = vld [vmem:[%s1 + $0x1c] sm:$0xf]
  %v39 = vld [vmem:[%s0 + $0x4] sm:$0x1]
  %v40 = vld [vmem:[%s0 + $0xc] sm:$0x1]
  %v41 = vld [vmem:[%s0 + $0x14] sm:$0x1]
  %v42 = vld [vmem:[%s0 + $0x1c] sm:$0x1]
  %v43 = vld [vmem:[%s0 + $0x24] sm:$0x1]
  %v44 = vld [vmem:[%s0 + $0x2c] sm:$0x1]
  %v45 = vld [vmem:[%s0 + $0x34] sm:$0x1]
  %v46 = vld [vmem:[%s0 + $0x3c] sm:$0x1]
  %v47 = vld [vmem:[%s0 + $0x4c] sm:$0x1]
  %v48 = vld [vmem:[%s0 + $0x54] sm:$0x1]
  %v49 = vld [vmem:[%s0 + $0x5c] sm:$0x1]
  %v50 = vld [vmem:[%s0 + $0x64] sm:$0x1]
  %v51 = vld [vmem:[%s0 + $0x6c] sm:$0x1]
  %v52 = vld [vmem:[%s0 + $0x74] sm:$0x1]
  %v53 = vld [vmem:[%s0 + $0x7c] sm:$0x1]
  %v54 = vld [vmem:[%s0 + $0x84] sm:$0x1]
  %vm55 = vsmask.f32 3328
  %vm56 = vsmask.f32 7440
  %vm57 = vmor %vm55, %vm56
  %v59 = vshrl.u32 %v15, 16
  %v61 = vrot.slane %v59, 4
  %v62 = vshll.u32 %v15, 16
  %v64 = vrot.slane %v62, 5
  %v65 = vor.u32 %v61, %v64
  %v66 = vrot.slane %v65, 4
  %v68 = vshll.u32 %v39, 16
  %v70 = vrot.slane %v68, 5
  %v71 = vsel %vm57, %v66, %v70
  %v73 = vshrl.u32 %v16, 16
  %v75 = vrot.slane %v73, 4
  %v76 = vshll.u32 %v16, 16
  %v78 = vrot.slane %v76, 5
  %v79 = vor.u32 %v75, %v78
  %v80 = vrot.slane %v79, 4
  %v82 = vshll.u32 %v40, 16
  %v84 = vrot.slane %v82, 5
  %v85 = vsel %vm57, %v80, %v84
  %v87 = vshrl.u32 %v17, 16
  %v89 = vrot.slane %v87, 4
  %v90 = vshll.u32 %v17, 16
  %v92 = vrot.slane %v90, 5
  %v93 = vor.u32 %v89, %v92
  %v94 = vrot.slane %v93, 4
  %v96 = vshll.u32 %v41, 16
  %v98 = vrot.slane %v96, 5
  %v99 = vsel %vm57, %v94, %v98
  %v101 = vshrl.u32 %v18, 16
  %v103 = vrot.slane %v101, 4
  %v104 = vshll.u32 %v18, 16
  %v106 = vrot.slane %v104, 5
  %v107 = vor.u32 %v103, %v106
  %v108 = vrot.slane %v107, 4
  %v110 = vshll.u32 %v42, 16
  %v112 = vrot.slane %v110, 5
  %v113 = vsel %vm57, %v108, %v112
  %v115 = vshrl.u32 %v19, 16
  %v117 = vrot.slane %v115, 4
  %v118 = vshll.u32 %v19, 16
  %v120 = vrot.slane %v118, 5
  %v121 = vor.u32 %v117, %v120
  %v122 = vrot.slane %v121, 4
  %v124 = vshll.u32 %v43, 16
  %v126 = vrot.slane %v124, 5
  %v127 = vsel %vm57, %v122, %v126
  %v129 = vshrl.u32 %v20, 16
  %v131 = vrot.slane %v129, 4
  %v132 = vshll.u32 %v20, 16
  %v134 = vrot.slane %v132, 5
  %v135 = vor.u32 %v131, %v134
  %v136 = vrot.slane %v135, 4
  %v138 = vshll.u32 %v44, 16
  %v140 = vrot.slane %v138, 5
  %v141 = vsel %vm57, %v136, %v140
  %v143 = vshrl.u32 %v21, 16
  %v145 = vrot.slane %v143, 4
  %v146 = vshll.u32 %v21, 16
  %v148 = vrot.slane %v146, 5
  %v149 = vor.u32 %v145, %v148
  %v150 = vrot.slane %v149, 4
  %v152 = vshll.u32 %v45, 16
  %v154 = vrot.slane %v152, 5
  %v155 = vsel %vm57, %v150, %v154
  %v157 = vshrl.u32 %v22, 16
  %v159 = vrot.slane %v157, 4
  %v160 = vshll.u32 %v22, 16
  %v162 = vrot.slane %v160, 5
  %v163 = vor.u32 %v159, %v162
  %v164 = vrot.slane %v163, 4
  %v166 = vshll.u32 %v46, 16
  %v168 = vrot.slane %v166, 5
  %v169 = vsel %vm57, %v164, %v168
  %v171 = vshrl.u32 %v23, 16
  %v173 = vrot.slane %v171, 4
  %v174 = vshll.u32 %v23, 16
  %v176 = vrot.slane %v174, 5
  %v177 = vor.u32 %v173, %v176
  %v178 = vrot.slane %v177, 4
  %v180 = vshll.u32 %v47, 16
  %v182 = vrot.slane %v180, 5
  %v183 = vsel %vm57, %v178, %v182
  %v185 = vshrl.u32 %v24, 16
  %v187 = vrot.slane %v185, 4
  %v188 = vshll.u32 %v24, 16
  %v190 = vrot.slane %v188, 5
  %v191 = vor.u32 %v187, %v190
  %v192 = vrot.slane %v191, 4
  %v194 = vshll.u32 %v48, 16
  %v196 = vrot.slane %v194, 5
  %v197 = vsel %vm57, %v192, %v196
  %v199 = vshrl.u32 %v25, 16
  %v201 = vrot.slane %v199, 4
  %v202 = vshll.u32 %v25, 16
  %v204 = vrot.slane %v202, 5
  %v205 = vor.u32 %v201, %v204
  %v206 = vrot.slane %v205, 4
  %v208 = vshll.u32 %v49, 16
  %v210 = vrot.slane %v208, 5
  %v211 = vsel %vm57, %v206, %v210
  %v213 = vshrl.u32 %v26, 16
  %v215 = vrot.slane %v213, 4
  %v216 = vshll.u32 %v26, 16
  %v218 = vrot.slane %v216, 5
  %v219 = vor.u32 %v215, %v218
  %v220 = vrot.slane %v219, 4
  %v222 = vshll.u32 %v50, 16
  %v224 = vrot.slane %v222, 5
  %v225 = vsel %vm57, %v220, %v224
  %v227 = vshrl.u32 %v27, 16
  %v229 = vrot.slane %v227, 4
  %v230 = vshll.u32 %v27, 16
  %v232 = vrot.slane %v230, 5
  %v233 = vor.u32 %v229, %v232
  %v234 = vrot.slane %v233, 4
  %v236 = vshll.u32 %v51, 16
  %v238 = vrot.slane %v236, 5
  %v239 = vsel %vm57, %v234, %v238
  %v241 = vshrl.u32 %v28, 16
  %v243 = vrot.slane %v241, 4
  %v244 = vshll.u32 %v28, 16
  %v246 = vrot.slane %v244, 5
  %v247 = vor.u32 %v243, %v246
  %v248 = vrot.slane %v247, 4
  %v250 = vshll.u32 %v52, 16
  %v252 = vrot.slane %v250, 5
  %v253 = vsel %vm57, %v248, %v252
  %v255 = vshrl.u32 %v29, 16
  %v257 = vrot.slane %v255, 4
  %v258 = vshll.u32 %v29, 16
  %v260 = vrot.slane %v258, 5
  %v261 = vor.u32 %v257, %v260
  %v262 = vrot.slane %v261, 4
  %v264 = vshll.u32 %v53, 16
  %v266 = vrot.slane %v264, 5
  %v267 = vsel %vm57, %v262, %v266
  %v269 = vshrl.u32 %v30, 16
  %v271 = vrot.slane %v269, 4
  %v272 = vshll.u32 %v30, 16
  %v274 = vrot.slane %v272, 5
  %v275 = vor.u32 %v271, %v274
  %v276 = vrot.slane %v275, 4
  %v278 = vshll.u32 %v54, 16
  %v280 = vrot.slane %v278, 5
  %v281 = vsel %vm57, %v276, %v280
  %s282 = scalar_lea.vmem %s1, 32
  %v283 = vld [vmem:[%s282] sm:$0xf]
  %v284 = vld [vmem:[%s282 + $0x4] sm:$0xf]
  %v285 = vld [vmem:[%s282 + $0x8] sm:$0xf]
  %v286 = vld [vmem:[%s282 + $0xc] sm:$0xf]
  %v287 = vld [vmem:[%s282 + $0x10] sm:$0xf]
  %v288 = vld [vmem:[%s282 + $0x14] sm:$0xf]
  %v289 = vld [vmem:[%s282 + $0x18] sm:$0xf]
  %v290 = vld [vmem:[%s282 + $0x1c] sm:$0xf]
  %v291 = vunpack.c.l.b16 %v71
  %v292 = vunpack.c.l.b16 %v85
  %v293 = vunpack.c.l.b16 %v99
  %v294 = vunpack.c.l.b16 %v113
  %v295 = vunpack.c.l.b16 %v127
  %v296 = vunpack.c.l.b16 %v141
  %v297 = vunpack.c.l.b16 %v155
  %v298 = vunpack.c.l.b16 %v169
  %v299 = vunpack.c.l.b16 %v183
  %v300 = vunpack.c.l.b16 %v197
  %v301 = vunpack.c.l.b16 %v211
  %v302 = vunpack.c.l.b16 %v225
  %v303 = vunpack.c.l.b16 %v239
  %v304 = vunpack.c.l.b16 %v253
  %v305 = vunpack.c.l.b16 %v267
  %v306 = vunpack.c.l.b16 %v281
  %v307 = vpack.c.b16 %v292, %v291
  %v308 = vpack.c.b16 %v294, %v293
  %v309 = vpack.c.b16 %v296, %v295
  %v310 = vpack.c.b16 %v298, %v297
  %v311 = vpack.c.b16 %v300, %v299
  %v312 = vpack.c.b16 %v302, %v301
  %v313 = vpack.c.b16 %v304, %v303
  %v314 = vpack.c.b16 %v306, %v305
  %v323 = vunpack.c.l.b16 %v283
  %v324 = vunpack.c.l.b16 %v284
  %v325 = vunpack.c.l.b16 %v285
  %v326 = vunpack.c.l.b16 %v286
  %v327 = vunpack.c.l.b16 %v287
  %v328 = vunpack.c.l.b16 %v288
  %v329 = vunpack.c.l.b16 %v289
  %v330 = vunpack.c.l.b16 %v290
  %v331 = vpack.c.b16 %v324, %v323
  %v332 = vpack.c.b16 %v326, %v325
  %v333 = vpack.c.b16 %v328, %v327
  %v334 = vpack.c.b16 %v330, %v329
  %vm339 = vcmask 523264
  %v341 = vsel %vm339, %v307, 0
  %v344 = vsel %vm339, %v308, 0
  %v347 = vsel %vm339, %v309, 0
  %v350 = vsel %vm339, %v310, 0
  %v353 = vsel %vm339, %v311, 0
  %v356 = vsel %vm339, %v312, 0
  %v359 = vsel %vm339, %v313, 0
  %v362 = vsel %vm339, %v314, 0
  %364 = vmatpush.bf16.msra.mxu0 0
  %365 = vmatpush.bf16.msra.mxu0 0
  %366 = vmatpush.bf16.msra.mxu0 0
  %367 = vmatpush.bf16.msra.mxu0 0
  %368 = vmatpush.bf16.msra.mxu0 %v334
  %369 = vmatpush.bf16.msra.mxu0 %v333
  %370 = vmatpush.bf16.msra.mxu0 %v332
  %371 = vmatpush.bf16.msra.mxu0 %v331
  %372 = vmatmul.bf16.gmra.mxu0 %v341
  %v373 = vpop.f32.mrf.mxu0
  %v374 = vadd.f32 0.0, %v373
  %v375 = vpop.f32.mrf.mxu0
  %v376 = vadd.f32 0.0, %v375
  %377 = vmatmul.bf16.gmra.mxu0 %v344
  %v378 = vpop.f32.mrf.mxu0
  %v379 = vadd.f32 0.0, %v378
  %v380 = vpop.f32.mrf.mxu0
  %v381 = vadd.f32 0.0, %v380
  %382 = vmatmul.bf16.gmra.mxu0 %v347
  %v383 = vpop.f32.mrf.mxu0
  %v384 = vadd.f32 0.0, %v383
  %v385 = vpop.f32.mrf.mxu0
  %v386 = vadd.f32 0.0, %v385
  %387 = vmatmul.bf16.gmra.mxu0 %v350
  %v388 = vpop.f32.mrf.mxu0
  %v389 = vadd.f32 0.0, %v388
  %v390 = vpop.f32.mrf.mxu0
  %v391 = vadd.f32 0.0, %v390
  %392 = vmatmul.bf16.gmra.mxu0 %v353
  %v393 = vpop.f32.mrf.mxu0
  %v394 = vadd.f32 0.0, %v393
  %v395 = vpop.f32.mrf.mxu0
  %v396 = vadd.f32 0.0, %v395
  %397 = vmatmul.bf16.gmra.mxu0 %v356
  %v398 = vpop.f32.mrf.mxu0
  %v399 = vadd.f32 0.0, %v398
  %v400 = vpop.f32.mrf.mxu0
  %v401 = vadd.f32 0.0, %v400
  %402 = vmatmul.bf16.gmra.mxu0 %v359
  %v403 = vpop.f32.mrf.mxu0
  %v404 = vadd.f32 0.0, %v403
  %v405 = vpop.f32.mrf.mxu0
  %v406 = vadd.f32 0.0, %v405
  %407 = vmatmul.bf16.gmra.mxu0 %v362
  %v408 = vpop.f32.mrf.mxu0
  %v409 = vadd.f32 0.0, %v408
  %v410 = vpop.f32.mrf.mxu0
  %v411 = vadd.f32 0.0, %v410
  %412 = vdwg.mxu0
  %v429 = vunpack.c.l.b16 %v15
  %v430 = vunpack.c.l.b16 %v16
  %v431 = vunpack.c.l.b16 %v17
  %v432 = vunpack.c.l.b16 %v18
  %v433 = vunpack.c.l.b16 %v19
  %v434 = vunpack.c.l.b16 %v20
  %v435 = vunpack.c.l.b16 %v21
  %v436 = vunpack.c.l.b16 %v22
  %v437 = vunpack.c.l.b16 %v23
  %v438 = vunpack.c.l.b16 %v24
  %v439 = vunpack.c.l.b16 %v25
  %v440 = vunpack.c.l.b16 %v26
  %v441 = vunpack.c.l.b16 %v27
  %v442 = vunpack.c.l.b16 %v28
  %v443 = vunpack.c.l.b16 %v29
  %v444 = vunpack.c.l.b16 %v30
  %v445 = vpack.c.b16 %v430, %v429
  %v446 = vpack.c.b16 %v432, %v431
  %v447 = vpack.c.b16 %v434, %v433
  %v448 = vpack.c.b16 %v436, %v435
  %v449 = vpack.c.b16 %v438, %v437
  %v450 = vpack.c.b16 %v440, %v439
  %v451 = vpack.c.b16 %v442, %v441
  %v452 = vpack.c.b16 %v444, %v443
  %v461 = vunpack.c.l.b16 %v31
  %v462 = vunpack.c.l.b16 %v32
  %v463 = vunpack.c.l.b16 %v33
  %v464 = vunpack.c.l.b16 %v34
  %v465 = vunpack.c.l.b16 %v35
  %v466 = vunpack.c.l.b16 %v36
  %v467 = vunpack.c.l.b16 %v37
  %v468 = vunpack.c.l.b16 %v38
  %v469 = vpack.c.b16 %v462, %v461
  %v470 = vpack.c.b16 %v464, %v463
  %v471 = vpack.c.b16 %v466, %v465
  %v472 = vpack.c.b16 %v468, %v467
  %v478 = vsel %vm339, %v445, 0
  %v481 = vsel %vm339, %v446, 0
  %v484 = vsel %vm339, %v447, 0
  %v487 = vsel %vm339, %v448, 0
  %v490 = vsel %vm339, %v449, 0
  %v493 = vsel %vm339, %v450, 0
  %v496 = vsel %vm339, %v451, 0
  %v499 = vsel %vm339, %v452, 0
  %501 = vmatpush.bf16.msra.mxu0 0
  %502 = vmatpush.bf16.msra.mxu0 0
  %503 = vmatpush.bf16.msra.mxu0 0
  %504 = vmatpush.bf16.msra.mxu0 0
  %505 = vmatpush.bf16.msra.mxu0 %v472
  %506 = vmatpush.bf16.msra.mxu0 %v471
  %507 = vmatpush.bf16.msra.mxu0 %v470
  %508 = vmatpush.bf16.msra.mxu0 %v469
  %509 = vmatmul.bf16.gmra.mxu0 %v478
  %v510 = vpop.f32.mrf.mxu0
  %v511 = vadd.f32 %v374, %v510
  %v512 = vpop.f32.mrf.mxu0
  %v513 = vadd.f32 %v376, %v512
  %514 = vmatmul.bf16.gmra.mxu0 %v481
  %v515 = vpop.f32.mrf.mxu0
  %v516 = vadd.f32 %v379, %v515
  %v517 = vpop.f32.mrf.mxu0
  %v518 = vadd.f32 %v381, %v517
  %519 = vmatmul.bf16.gmra.mxu0 %v484
  %v520 = vpop.f32.mrf.mxu0
  %v521 = vadd.f32 %v384, %v520
  %v522 = vpop.f32.mrf.mxu0
  %v523 = vadd.f32 %v386, %v522
  %524 = vmatmul.bf16.gmra.mxu0 %v487
  %v525 = vpop.f32.mrf.mxu0
  %v526 = vadd.f32 %v389, %v525
  %v527 = vpop.f32.mrf.mxu0
  %v528 = vadd.f32 %v391, %v527
  %529 = vmatmul.bf16.gmra.mxu0 %v490
  %v530 = vpop.f32.mrf.mxu0
  %v531 = vadd.f32 %v394, %v530
  %v532 = vpop.f32.mrf.mxu0
  %v533 = vadd.f32 %v396, %v532
  %534 = vmatmul.bf16.gmra.mxu0 %v493
  %v535 = vpop.f32.mrf.mxu0
  %v536 = vadd.f32 %v399, %v535
  %v537 = vpop.f32.mrf.mxu0
  %v538 = vadd.f32 %v401, %v537
  %539 = vmatmul.bf16.gmra.mxu0 %v496
  %v540 = vpop.f32.mrf.mxu0
  %v541 = vadd.f32 %v404, %v540
  %v542 = vpop.f32.mrf.mxu0
  %v543 = vadd.f32 %v406, %v542
  %544 = vmatmul.bf16.gmra.mxu0 %v499
  %v545 = vpop.f32.mrf.mxu0
  %v546 = vadd.f32 %v409, %v545
  %v547 = vpop.f32.mrf.mxu0
  %v548 = vadd.f32 %v411, %v547
  %549 = vdwg.mxu0
  %s550 = scalar_lea.vmem %s0, 8
  %v551 = vld [vmem:[%s550] sm:$0xf]
  %v552 = vld [vmem:[%s550 + $0x8] sm:$0xf]
  %v553 = vld [vmem:[%s550 + $0x10] sm:$0xf]
  %v554 = vld [vmem:[%s550 + $0x18] sm:$0xf]
  %v555 = vld [vmem:[%s550 + $0x20] sm:$0xf]
  %v556 = vld [vmem:[%s550 + $0x28] sm:$0xf]
  %v557 = vld [vmem:[%s550 + $0x30] sm:$0xf]
  %v558 = vld [vmem:[%s550 + $0x38] sm:$0xf]
  %v559 = vld [vmem:[%s550 + $0x48] sm:$0xf]
  %v560 = vld [vmem:[%s550 + $0x50] sm:$0xf]
  %v561 = vld [vmem:[%s550 + $0x58] sm:$0xf]
  %v562 = vld [vmem:[%s550 + $0x60] sm:$0xf]
  %v563 = vld [vmem:[%s550 + $0x68] sm:$0xf]
  %v564 = vld [vmem:[%s550 + $0x70] sm:$0xf]
  %v565 = vld [vmem:[%s550 + $0x78] sm:$0xf]
  %v566 = vld [vmem:[%s550 + $0x80] sm:$0xf]
  %s567 = scalar_lea.vmem %s1, 64
  %v568 = vld [vmem:[%s567] sm:$0xf]
  %v569 = vld [vmem:[%s567 + $0x4] sm:$0xf]
  %v570 = vld [vmem:[%s567 + $0x8] sm:$0xf]
  %v571 = vld [vmem:[%s567 + $0xc] sm:$0xf]
  %v572 = vld [vmem:[%s567 + $0x10] sm:$0xf]
  %v573 = vld [vmem:[%s567 + $0x14] sm:$0xf]
  %v574 = vld [vmem:[%s567 + $0x18] sm:$0xf]
  %v575 = vld [vmem:[%s567 + $0x1c] sm:$0xf]
  %v592 = vunpack.c.l.b16 %v551
  %v593 = vunpack.c.l.b16 %v552
  %v594 = vunpack.c.l.b16 %v553
  %v595 = vunpack.c.l.b16 %v554
  %v596 = vunpack.c.l.b16 %v555
  %v597 = vunpack.c.l.b16 %v556
  %v598 = vunpack.c.l.b16 %v557
  %v599 = vunpack.c.l.b16 %v558
  %v600 = vunpack.c.l.b16 %v559
  %v601 = vunpack.c.l.b16 %v560
  %v602 = vunpack.c.l.b16 %v561
  %v603 = vunpack.c.l.b16 %v562
  %v604 = vunpack.c.l.b16 %v563
  %v605 = vunpack.c.l.b16 %v564
  %v606 = vunpack.c.l.b16 %v565
  %v607 = vunpack.c.l.b16 %v566
  %v608 = vpack.c.b16 %v593, %v592
  %v609 = vpack.c.b16 %v595, %v594
  %v610 = vpack.c.b16 %v597, %v596
  %v611 = vpack.c.b16 %v599, %v598
  %v612 = vpack.c.b16 %v601, %v600
  %v613 = vpack.c.b16 %v603, %v602
  %v614 = vpack.c.b16 %v605, %v604
  %v615 = vpack.c.b16 %v607, %v606
  %v624 = vunpack.c.l.b16 %v568
  %v625 = vunpack.c.l.b16 %v569
  %v626 = vunpack.c.l.b16 %v570
  %v627 = vunpack.c.l.b16 %v571
  %v628 = vunpack.c.l.b16 %v572
  %v629 = vunpack.c.l.b16 %v573
  %v630 = vunpack.c.l.b16 %v574
  %v631 = vunpack.c.l.b16 %v575
  %v632 = vpack.c.b16 %v625, %v624
  %v633 = vpack.c.b16 %v627, %v626
  %v634 = vpack.c.b16 %v629, %v628
  %v635 = vpack.c.b16 %v631, %v630
  %v641 = vsel %vm339, %v608, 0
  %v644 = vsel %vm339, %v609, 0
  %v647 = vsel %vm339, %v610, 0
  %v650 = vsel %vm339, %v611, 0
  %v653 = vsel %vm339, %v612, 0
  %v656 = vsel %vm339, %v613, 0
  %v659 = vsel %vm339, %v614, 0
  %v662 = vsel %vm339, %v615, 0
  %664 = vmatpush.bf16.msra.mxu0 0
  %665 = vmatpush.bf16.msra.mxu0 0
  %666 = vmatpush.bf16.msra.mxu0 0
  %667 = vmatpush.bf16.msra.mxu0 0
  %668 = vmatpush.bf16.msra.mxu0 %v635
  %669 = vmatpush.bf16.msra.mxu0 %v634
  %670 = vmatpush.bf16.msra.mxu0 %v633
  %671 = vmatpush.bf16.msra.mxu0 %v632
  %672 = vmatmul.bf16.gmra.mxu0 %v641
  %v673 = vpop.f32.mrf.mxu0
  %v674 = vadd.f32 0.0, %v673
  %v675 = vpop.f32.mrf.mxu0
  %v676 = vadd.f32 0.0, %v675
  %677 = vmatmul.bf16.gmra.mxu0 %v644
  %v678 = vpop.f32.mrf.mxu0
  %v679 = vadd.f32 0.0, %v678
  %v680 = vpop.f32.mrf.mxu0
  %v681 = vadd.f32 0.0, %v680
  %682 = vmatmul.bf16.gmra.mxu0 %v647
  %v683 = vpop.f32.mrf.mxu0
  %v684 = vadd.f32 0.0, %v683
  %v685 = vpop.f32.mrf.mxu0
  %v686 = vadd.f32 0.0, %v685
  %687 = vmatmul.bf16.gmra.mxu0 %v650
  %v688 = vpop.f32.mrf.mxu0
  %v689 = vadd.f32 0.0, %v688
  %v690 = vpop.f32.mrf.mxu0
  %v691 = vadd.f32 0.0, %v690
  %692 = vmatmul.bf16.gmra.mxu0 %v653
  %v693 = vpop.f32.mrf.mxu0
  %v694 = vadd.f32 0.0, %v693
  %v695 = vpop.f32.mrf.mxu0
  %v696 = vadd.f32 0.0, %v695
  %697 = vmatmul.bf16.gmra.mxu0 %v656
  %v698 = vpop.f32.mrf.mxu0
  %v699 = vadd.f32 0.0, %v698
  %v700 = vpop.f32.mrf.mxu0
  %v701 = vadd.f32 0.0, %v700
  %702 = vmatmul.bf16.gmra.mxu0 %v659
  %v703 = vpop.f32.mrf.mxu0
  %v704 = vadd.f32 0.0, %v703
  %v705 = vpop.f32.mrf.mxu0
  %v706 = vadd.f32 0.0, %v705
  %707 = vmatmul.bf16.gmra.mxu0 %v662
  %v708 = vpop.f32.mrf.mxu0
  %v709 = vadd.f32 0.0, %v708
  %v710 = vpop.f32.mrf.mxu0
  %v711 = vadd.f32 0.0, %v710
  %712 = vdwg.mxu0
  %v713 = vadd.f32 %v511, %v674
  %v714 = vadd.f32 %v513, %v676
  %v715 = vadd.f32 %v516, %v679
  %v716 = vadd.f32 %v518, %v681
  %v717 = vadd.f32 %v521, %v684
  %v718 = vadd.f32 %v523, %v686
  %v719 = vadd.f32 %v526, %v689
  %v720 = vadd.f32 %v528, %v691
  %v721 = vadd.f32 %v531, %v694
  %v722 = vadd.f32 %v533, %v696
  %v723 = vadd.f32 %v536, %v699
  %v724 = vadd.f32 %v538, %v701
  %v725 = vadd.f32 %v541, %v704
  %v726 = vadd.f32 %v543, %v706
  %v727 = vadd.f32 %v546, %v709
  %v728 = vadd.f32 %v548, %v711
  %v729 = vld [vmem:[%s550] sm:$0xf]
  %v730 = vld [vmem:[%s550 + $0x4] sm:$0x1]
  %v731 = vld [vmem:[%s550 + $0x8] sm:$0xf]
  %v732 = vld [vmem:[%s550 + $0xc] sm:$0x1]
  %v733 = vld [vmem:[%s550 + $0x10] sm:$0xf]
  %v734 = vld [vmem:[%s550 + $0x14] sm:$0x1]
  %v735 = vld [vmem:[%s550 + $0x18] sm:$0xf]
  %v736 = vld [vmem:[%s550 + $0x1c] sm:$0x1]
  %v737 = vld [vmem:[%s550 + $0x20] sm:$0xf]
  %v738 = vld [vmem:[%s550 + $0x24] sm:$0x1]
  %v739 = vld [vmem:[%s550 + $0x28] sm:$0xf]
  %v740 = vld [vmem:[%s550 + $0x2c] sm:$0x1]
  %v741 = vld [vmem:[%s550 + $0x30] sm:$0xf]
  %v742 = vld [vmem:[%s550 + $0x34] sm:$0x1]
  %v743 = vld [vmem:[%s550 + $0x38] sm:$0xf]
  %v744 = vld [vmem:[%s550 + $0x3c] sm:$0x1]
  %v745 = vld [vmem:[%s550 + $0x48] sm:$0xf]
  %v746 = vld [vmem:[%s550 + $0x4c] sm:$0x1]
  %v747 = vld [vmem:[%s550 + $0x50] sm:$0xf]
  %v748 = vld [vmem:[%s550 + $0x54] sm:$0x1]
  %v749 = vld [vmem:[%s550 + $0x58] sm:$0xf]
  %v750 = vld [vmem:[%s550 + $0x5c] sm:$0x1]
  %v751 = vld [vmem:[%s550 + $0x60] sm:$0xf]
  %v752 = vld [vmem:[%s550 + $0x64] sm:$0x1]
  %v753 = vld [vmem:[%s550 + $0x68] sm:$0xf]
  %v754 = vld [vmem:[%s550 + $0x6c] sm:$0x1]
  %v755 = vld [vmem:[%s550 + $0x70] sm:$0xf]
  %v756 = vld [vmem:[%s550 + $0x74] sm:$0x1]
  %v757 = vld [vmem:[%s550 + $0x78] sm:$0xf]
  %v758 = vld [vmem:[%s550 + $0x7c] sm:$0x1]
  %v759 = vld [vmem:[%s550 + $0x80] sm:$0xf]
  %v760 = vld [vmem:[%s550 + $0x84] sm:$0x1]
  %v762 = vshrl.u32 %v729, 16
  %v764 = vrot.slane %v762, 4
  %v765 = vshll.u32 %v729, 16
  %v767 = vrot.slane %v765, 5
  %v768 = vor.u32 %v764, %v767
  %v769 = vrot.slane %v768, 4
  %v771 = vshll.u32 %v730, 16
  %v773 = vrot.slane %v771, 5
  %v774 = vsel %vm57, %v769, %v773
  %v776 = vshrl.u32 %v731, 16
  %v778 = vrot.slane %v776, 4
  %v779 = vshll.u32 %v731, 16
  %v781 = vrot.slane %v779, 5
  %v782 = vor.u32 %v778, %v781
  %v783 = vrot.slane %v782, 4
  %v785 = vshll.u32 %v732, 16
  %v787 = vrot.slane %v785, 5
  %v788 = vsel %vm57, %v783, %v787
  %v790 = vshrl.u32 %v733, 16
  %v792 = vrot.slane %v790, 4
  %v793 = vshll.u32 %v733, 16
  %v795 = vrot.slane %v793, 5
  %v796 = vor.u32 %v792, %v795
  %v797 = vrot.slane %v796, 4
  %v799 = vshll.u32 %v734, 16
  %v801 = vrot.slane %v799, 5
  %v802 = vsel %vm57, %v797, %v801
  %v804 = vshrl.u32 %v735, 16
  %v806 = vrot.slane %v804, 4
  %v807 = vshll.u32 %v735, 16
  %v809 = vrot.slane %v807, 5
  %v810 = vor.u32 %v806, %v809
  %v811 = vrot.slane %v810, 4
  %v813 = vshll.u32 %v736, 16
  %v815 = vrot.slane %v813, 5
  %v816 = vsel %vm57, %v811, %v815
  %v818 = vshrl.u32 %v737, 16
  %v820 = vrot.slane %v818, 4
  %v821 = vshll.u32 %v737, 16
  %v823 = vrot.slane %v821, 5
  %v824 = vor.u32 %v820, %v823
  %v825 = vrot.slane %v824, 4
  %v827 = vshll.u32 %v738, 16
  %v829 = vrot.slane %v827, 5
  %v830 = vsel %vm57, %v825, %v829
  %v832 = vshrl.u32 %v739, 16
  %v834 = vrot.slane %v832, 4
  %v835 = vshll.u32 %v739, 16
  %v837 = vrot.slane %v835, 5
  %v838 = vor.u32 %v834, %v837
  %v839 = vrot.slane %v838, 4
  %v841 = vshll.u32 %v740, 16
  %v843 = vrot.slane %v841, 5
  %v844 = vsel %vm57, %v839, %v843
  %v846 = vshrl.u32 %v741, 16
  %v848 = vrot.slane %v846, 4
  %v849 = vshll.u32 %v741, 16
  %v851 = vrot.slane %v849, 5
  %v852 = vor.u32 %v848, %v851
  %v853 = vrot.slane %v852, 4
  %v855 = vshll.u32 %v742, 16
  %v857 = vrot.slane %v855, 5
  %v858 = vsel %vm57, %v853, %v857
  %v860 = vshrl.u32 %v743, 16
  %v862 = vrot.slane %v860, 4
  %v863 = vshll.u32 %v743, 16
  %v865 = vrot.slane %v863, 5
  %v866 = vor.u32 %v862, %v865
  %v867 = vrot.slane %v866, 4
  %v869 = vshll.u32 %v744, 16
  %v871 = vrot.slane %v869, 5
  %v872 = vsel %vm57, %v867, %v871
  %v874 = vshrl.u32 %v745, 16
  %v876 = vrot.slane %v874, 4
  %v877 = vshll.u32 %v745, 16
  %v879 = vrot.slane %v877, 5
  %v880 = vor.u32 %v876, %v879
  %v881 = vrot.slane %v880, 4
  %v883 = vshll.u32 %v746, 16
  %v885 = vrot.slane %v883, 5
  %v886 = vsel %vm57, %v881, %v885
  %v888 = vshrl.u32 %v747, 16
  %v890 = vrot.slane %v888, 4
  %v891 = vshll.u32 %v747, 16
  %v893 = vrot.slane %v891, 5
  %v894 = vor.u32 %v890, %v893
  %v895 = vrot.slane %v894, 4
  %v897 = vshll.u32 %v748, 16
  %v899 = vrot.slane %v897, 5
  %v900 = vsel %vm57, %v895, %v899
  %v902 = vshrl.u32 %v749, 16
  %v904 = vrot.slane %v902, 4
  %v905 = vshll.u32 %v749, 16
  %v907 = vrot.slane %v905, 5
  %v908 = vor.u32 %v904, %v907
  %v909 = vrot.slane %v908, 4
  %v911 = vshll.u32 %v750, 16
  %v913 = vrot.slane %v911, 5
  %v914 = vsel %vm57, %v909, %v913
  %v916 = vshrl.u32 %v751, 16
  %v918 = vrot.slane %v916, 4
  %v919 = vshll.u32 %v751, 16
  %v921 = vrot.slane %v919, 5
  %v922 = vor.u32 %v918, %v921
  %v923 = vrot.slane %v922, 4
  %v925 = vshll.u32 %v752, 16
  %v927 = vrot.slane %v925, 5
  %v928 = vsel %vm57, %v923, %v927
  %v930 = vshrl.u32 %v753, 16
  %v932 = vrot.slane %v930, 4
  %v933 = vshll.u32 %v753, 16
  %v935 = vrot.slane %v933, 5
  %v936 = vor.u32 %v932, %v935
  %v937 = vrot.slane %v936, 4
  %v939 = vshll.u32 %v754, 16
  %v941 = vrot.slane %v939, 5
  %v942 = vsel %vm57, %v937, %v941
  %v944 = vshrl.u32 %v755, 16
  %v946 = vrot.slane %v944, 4
  %v947 = vshll.u32 %v755, 16
  %v949 = vrot.slane %v947, 5
  %v950 = vor.u32 %v946, %v949
  %v951 = vrot.slane %v950, 4
  %v953 = vshll.u32 %v756, 16
  %v955 = vrot.slane %v953, 5
  %v956 = vsel %vm57, %v951, %v955
  %v958 = vshrl.u32 %v757, 16
  %v960 = vrot.slane %v958, 4
  %v961 = vshll.u32 %v757, 16
  %v963 = vrot.slane %v961, 5
  %v964 = vor.u32 %v960, %v963
  %v965 = vrot.slane %v964, 4
  %v967 = vshll.u32 %v758, 16
  %v969 = vrot.slane %v967, 5
  %v970 = vsel %vm57, %v965, %v969
  %v972 = vshrl.u32 %v759, 16
  %v974 = vrot.slane %v972, 4
  %v975 = vshll.u32 %v759, 16
  %v977 = vrot.slane %v975, 5
  %v978 = vor.u32 %v974, %v977
  %v979 = vrot.slane %v978, 4
  %v981 = vshll.u32 %v760, 16
  %v983 = vrot.slane %v981, 5
  %v984 = vsel %vm57, %v979, %v983
  %s985 = scalar_lea.vmem %s1, 96
  %v986 = vld [vmem:[%s985] sm:$0xf]
  %v987 = vld [vmem:[%s985 + $0x4] sm:$0xf]
  %v988 = vld [vmem:[%s985 + $0x8] sm:$0xf]
  %v989 = vld [vmem:[%s985 + $0xc] sm:$0xf]
  %v990 = vld [vmem:[%s985 + $0x10] sm:$0xf]
  %v991 = vld [vmem:[%s985 + $0x14] sm:$0xf]
  %v992 = vld [vmem:[%s985 + $0x18] sm:$0xf]
  %v993 = vld [vmem:[%s985 + $0x1c] sm:$0xf]
  %v994 = vunpack.c.l.b16 %v774
  %v995 = vunpack.c.l.b16 %v788
  %v996 = vunpack.c.l.b16 %v802
  %v997 = vunpack.c.l.b16 %v816
  %v998 = vunpack.c.l.b16 %v830
  %v999 = vunpack.c.l.b16 %v844
  %v1000 = vunpack.c.l.b16 %v858
  %v1001 = vunpack.c.l.b16 %v872
  %v1002 = vunpack.c.l.b16 %v886
  %v1003 = vunpack.c.l.b16 %v900
  %v1004 = vunpack.c.l.b16 %v914
  %v1005 = vunpack.c.l.b16 %v928
  %v1006 = vunpack.c.l.b16 %v942
  %v1007 = vunpack.c.l.b16 %v956
  %v1008 = vunpack.c.l.b16 %v970
  %v1009 = vunpack.c.l.b16 %v984
  %v1010 = vpack.c.b16 %v995, %v994
  %v1011 = vpack.c.b16 %v997, %v996
  %v1012 = vpack.c.b16 %v999, %v998
  %v1013 = vpack.c.b16 %v1001, %v1000
  %v1014 = vpack.c.b16 %v1003, %v1002
  %v1015 = vpack.c.b16 %v1005, %v1004
  %v1016 = vpack.c.b16 %v1007, %v1006
  %v1017 = vpack.c.b16 %v1009, %v1008
  %v1026 = vunpack.c.l.b16 %v986
  %v1027 = vunpack.c.l.b16 %v987
  %v1028 = vunpack.c.l.b16 %v988
  %v1029 = vunpack.c.l.b16 %v989
  %v1030 = vunpack.c.l.b16 %v990
  %v1031 = vunpack.c.l.b16 %v991
  %v1032 = vunpack.c.l.b16 %v992
  %v1033 = vunpack.c.l.b16 %v993
  %v1034 = vpack.c.b16 %v1027, %v1026
  %v1035 = vpack.c.b16 %v1029, %v1028
  %v1036 = vpack.c.b16 %v1031, %v1030
  %v1037 = vpack.c.b16 %v1033, %v1032
  %v1043 = vsel %vm339, %v1010, 0
  %v1046 = vsel %vm339, %v1011, 0
  %v1049 = vsel %vm339, %v1012, 0
  %v1052 = vsel %vm339, %v1013, 0
  %v1055 = vsel %vm339, %v1014, 0
  %v1058 = vsel %vm339, %v1015, 0
  %v1061 = vsel %vm339, %v1016, 0
  %v1064 = vsel %vm339, %v1017, 0
  %1066 = vmatpush.bf16.msra.mxu0 0
  %1067 = vmatpush.bf16.msra.mxu0 0
  %1068 = vmatpush.bf16.msra.mxu0 0
  %1069 = vmatpush.bf16.msra.mxu0 0
  %1070 = vmatpush.bf16.msra.mxu0 %v1037
  %1071 = vmatpush.bf16.msra.mxu0 %v1036
  %1072 = vmatpush.bf16.msra.mxu0 %v1035
  %1073 = vmatpush.bf16.msra.mxu0 %v1034
  %1074 = vmatmul.bf16.gmra.mxu0 %v1043
  %v1075 = vpop.f32.mrf.mxu0
  %v1076 = vadd.f32 0.0, %v1075
  %v1077 = vpop.f32.mrf.mxu0
  %v1078 = vadd.f32 0.0, %v1077
  %1079 = vmatmul.bf16.gmra.mxu0 %v1046
  %v1080 = vpop.f32.mrf.mxu0
  %v1081 = vadd.f32 0.0, %v1080
  %v1082 = vpop.f32.mrf.mxu0
  %v1083 = vadd.f32 0.0, %v1082
  %1084 = vmatmul.bf16.gmra.mxu0 %v1049
  %v1085 = vpop.f32.mrf.mxu0
  %v1086 = vadd.f32 0.0, %v1085
  %v1087 = vpop.f32.mrf.mxu0
  %v1088 = vadd.f32 0.0, %v1087
  %1089 = vmatmul.bf16.gmra.mxu0 %v1052
  %v1090 = vpop.f32.mrf.mxu0
  %v1091 = vadd.f32 0.0, %v1090
  %v1092 = vpop.f32.mrf.mxu0
  %v1093 = vadd.f32 0.0, %v1092
  %1094 = vmatmul.bf16.gmra.mxu0 %v1055
  %v1095 = vpop.f32.mrf.mxu0
  %v1096 = vadd.f32 0.0, %v1095
  %v1097 = vpop.f32.mrf.mxu0
  %v1098 = vadd.f32 0.0, %v1097
  %1099 = vmatmul.bf16.gmra.mxu0 %v1058
  %v1100 = vpop.f32.mrf.mxu0
  %v1101 = vadd.f32 0.0, %v1100
  %v1102 = vpop.f32.mrf.mxu0
  %v1103 = vadd.f32 0.0, %v1102
  %1104 = vmatmul.bf16.gmra.mxu0 %v1061
  %v1105 = vpop.f32.mrf.mxu0
  %v1106 = vadd.f32 0.0, %v1105
  %v1107 = vpop.f32.mrf.mxu0
  %v1108 = vadd.f32 0.0, %v1107
  %1109 = vmatmul.bf16.gmra.mxu0 %v1064
  %v1110 = vpop.f32.mrf.mxu0
  %v1111 = vadd.f32 0.0, %v1110
  %v1112 = vpop.f32.mrf.mxu0
  %v1113 = vadd.f32 0.0, %v1112
  %1114 = vdwg.mxu0
  %v1115 = vadd.f32 %v713, %v1076
  %v1116 = vadd.f32 %v714, %v1078
  %v1117 = vadd.f32 %v715, %v1081
  %v1118 = vadd.f32 %v716, %v1083
  %v1119 = vadd.f32 %v717, %v1086
  %v1120 = vadd.f32 %v718, %v1088
  %v1121 = vadd.f32 %v719, %v1091
  %v1122 = vadd.f32 %v720, %v1093
  %v1123 = vadd.f32 %v721, %v1096
  %v1124 = vadd.f32 %v722, %v1098
  %v1125 = vadd.f32 %v723, %v1101
  %v1126 = vadd.f32 %v724, %v1103
  %v1127 = vadd.f32 %v725, %v1106
  %v1128 = vadd.f32 %v726, %v1108
  %v1129 = vadd.f32 %v727, %v1111
  %v1130 = vadd.f32 %v728, %v1113
  %v1131 = vld [vmem:[%s2] sm:$0x1]
  %v1133 = vperm.slane %v1131, 0
  %v1135 = vadd.f32 %v1115, %v1133
  %v1136 = vadd.f32 %v1116, %v1133
  %v1137 = vadd.f32 %v1117, %v1133
  %v1138 = vadd.f32 %v1118, %v1133
  %v1139 = vadd.f32 %v1119, %v1133
  %v1140 = vadd.f32 %v1120, %v1133
  %v1141 = vadd.f32 %v1121, %v1133
  %v1142 = vadd.f32 %v1122, %v1133
  %v1143 = vadd.f32 %v1123, %v1133
  %v1144 = vadd.f32 %v1124, %v1133
  %v1145 = vadd.f32 %v1125, %v1133
  %v1146 = vadd.f32 %v1126, %v1133
  %v1147 = vadd.f32 %v1127, %v1133
  %v1148 = vadd.f32 %v1128, %v1133
  %v1149 = vadd.f32 %v1129, %v1133
  %v1150 = vadd.f32 %v1130, %v1133
  %v1151 = vmax.f32 %v1135, 0.0
  %v1152 = vmax.f32 %v1136, 0.0
  %v1153 = vmax.f32 %v1137, 0.0
  %v1154 = vmax.f32 %v1138, 0.0
  %v1155 = vmax.f32 %v1139, 0.0
  %v1156 = vmax.f32 %v1140, 0.0
  %v1157 = vmax.f32 %v1141, 0.0
  %v1158 = vmax.f32 %v1142, 0.0
  %v1159 = vmax.f32 %v1143, 0.0
  %v1160 = vmax.f32 %v1144, 0.0
  %v1161 = vmax.f32 %v1145, 0.0
  %v1162 = vmax.f32 %v1146, 0.0
  %v1163 = vmax.f32 %v1147, 0.0
  %v1164 = vmax.f32 %v1148, 0.0
  %v1165 = vmax.f32 %v1149, 0.0
  %v1166 = vmax.f32 %v1150, 0.0
  %v1167 = vpack.c.bf16 %v1151, %v1151
  %v1168 = vpack.c.bf16 %v1152, %v1152
  %v1169 = vpack.c.bf16 %v1153, %v1153
  %v1170 = vpack.c.bf16 %v1154, %v1154
  %v1171 = vpack.c.bf16 %v1155, %v1155
  %v1172 = vpack.c.bf16 %v1156, %v1156
  %v1173 = vpack.c.bf16 %v1157, %v1157
  %v1174 = vpack.c.bf16 %v1158, %v1158
  %v1175 = vpack.c.bf16 %v1159, %v1159
  %v1176 = vpack.c.bf16 %v1160, %v1160
  %v1177 = vpack.c.bf16 %v1161, %v1161
  %v1178 = vpack.c.bf16 %v1162, %v1162
  %v1179 = vpack.c.bf16 %v1163, %v1163
  %v1180 = vpack.c.bf16 %v1164, %v1164
  %v1181 = vpack.c.bf16 %v1165, %v1165
  %v1182 = vpack.c.bf16 %v1166, %v1166
  %vm1183 = vcmask 257024
  %1184 = vst.msk [vmem:[%s3] sm:$0xf] %vm1183, %v1167
  %1185 = vst.msk [vmem:[%s3 + $0x4] sm:$0xf] %vm1183, %v1168
  %1186 = vst.msk [vmem:[%s3 + $0x8] sm:$0xf] %vm1183, %v1169
  %1187 = vst.msk [vmem:[%s3 + $0xc] sm:$0xf] %vm1183, %v1170
  %1188 = vst.msk [vmem:[%s3 + $0x10] sm:$0xf] %vm1183, %v1171
  %1189 = vst.msk [vmem:[%s3 + $0x14] sm:$0xf] %vm1183, %v1172
  %1190 = vst.msk [vmem:[%s3 + $0x18] sm:$0xf] %vm1183, %v1173
  %1191 = vst.msk [vmem:[%s3 + $0x1c] sm:$0xf] %vm1183, %v1174
  %1192 = vst.msk [vmem:[%s3 + $0x20] sm:$0xf] %vm1183, %v1175
  %1193 = vst.msk [vmem:[%s3 + $0x24] sm:$0xf] %vm1183, %v1176
  %1194 = vst.msk [vmem:[%s3 + $0x28] sm:$0xf] %vm1183, %v1177
  %1195 = vst.msk [vmem:[%s3 + $0x2c] sm:$0xf] %vm1183, %v1178
  %1196 = vst.msk [vmem:[%s3 + $0x30] sm:$0xf] %vm1183, %v1179
  %1197 = vst.msk [vmem:[%s3 + $0x34] sm:$0xf] %vm1183, %v1180
  %1198 = vst.msk [vmem:[%s3 + $0x38] sm:$0xf] %vm1183, %v1181
  %1199 = vst.msk [vmem:[%s3 + $0x3c] sm:$0xf] %vm1183, %v1182
  // Predicated region
  $region14: #{_lambda_.2} parent=0 // pred_check
    _
  $region15: #{_lambda_.2} parent=0 // pred_check_branch
    %1201 = sbr.rel (0) target = $region17
  $region16: #{_lambda_.2} parent=0 // pred_region
    _
  $region17: #{_lambda_.2} parent=0 // pred_fallthru
    _
  // Predicated region
  $region18: #{_lambda_.2} parent=0 // pred_check
    _
  $region19: #{_lambda_.2} parent=0 // pred_check_branch
    %1203 = sbr.rel (0) target = $region21
  $region20: #{_lambda_.2} parent=0 // pred_region
    _
  $region21: #{_lambda_.2} parent=0 // pred_fallthru
    _

// kernel: _lambda_.3
$region0: #{_lambda_.3}
  #allocation0 [shape = 'u32[]', space=smem, size = 0x4, offset = 0x4, fixed_abs, tag = 'smem constant byte address 0x4 - core index']
  #allocation1 [shape = 'u32[72,128]{1,0:T(1,128)}', space=vmem, size = 0x9000, scoped, tag = 'internal scratch']
  %s0 = inlined_call_operand.vmem [shape: bf16[2,4,4,128], index: 0, kind: input, shape index: {}]
  %s1 = inlined_call_operand.vmem [shape: bf16[4,128,64], index: 1, kind: input, shape index: {}]
  %s2 = inlined_call_operand.vmem [shape: f32[1,64], index: 2, kind: input, shape index: {}]
  %s3 = inlined_call_operand.vmem [shape: bf16[9,64,64], index: 3, kind: input, shape index: {}]
  %s4 = inlined_call_operand.vmem [shape: f32[1,64], index: 4, kind: input, shape index: {}]
  %s5 = inlined_call_operand.vmem [shape: bf16[1,64,512], index: 5, kind: input, shape index: {}]
  %s6 = inlined_call_operand.vmem [shape: f32[1,512], index: 6, kind: input, shape index: {}]
  %s7 = inlined_call_operand.vmem [shape: bf16[512,128], index: 7, kind: input, shape index: {}]
  %s8 = inlined_call_operand.vmem [shape: f32[1,128], index: 8, kind: input, shape index: {}]
  %s9 = inlined_call_operand.hbm [shape: f32[2,6], index: 9, kind: output, shape index: {}]
  %s10 = sld [smem:[#allocation0]]
  $region46: #{_lambda_.3} parent=0
    _
  %s12 = ssub.s32 1, %s10
  %s13 = scalar_select 0, %s12, %s10
  $region1: #{_lambda_.3} parent=0
    #allocation2 [shape = 'u8[1024]{0}', space=vmem, size = 0x400, scoped, tag = 'output window, operand 0, single buffered']
    #allocation3 [shape = 's32[1]{0}', space=sflag, size = 0x4, scoped, tag = 'scoped memory for _lambda_.3']
    %14 = vsyncpa [#allocation3], 0
    // Predicated region
    $region2: #{_lambda_.3} parent=1 // pred_check
      _
    $region3: #{_lambda_.3} parent=1 // pred_check_branch
      %16 = sbr.rel (0) target = $region5
    $region4: #{_lambda_.3} parent=1 // pred_region
      _
    $region5: #{_lambda_.3} parent=1 // pred_fallthru
      _
    // Predicated region
    $region6: #{_lambda_.3} parent=1 // pred_check
      _
    $region7: #{_lambda_.3} parent=1 // pred_check_branch
      %18 = sbr.rel (0) target = $region9
    $region8: #{_lambda_.3} parent=1 // pred_region
      _
    $region9: #{_lambda_.3} parent=1 // pred_fallthru
      _
    // Predicated region
    $region10: #{_lambda_.3} parent=1 // pred_check
      _
    $region11: #{_lambda_.3} parent=1 // pred_check_branch
      %20 = sbr.rel (0) target = $region13
    $region12: #{_lambda_.3} parent=1 // pred_region
      _
    $region13: #{_lambda_.3} parent=1 // pred_fallthru
      _
    // Predicated region
    $region14: #{_lambda_.3} parent=1 // pred_check
      _
    $region15: #{_lambda_.3} parent=1 // pred_check_branch
      %22 = sbr.rel (0) target = $region17
    $region16: #{_lambda_.3} parent=1 // pred_region
      _
    $region17: #{_lambda_.3} parent=1 // pred_fallthru
      _
    // Predicated region
    $region18: #{_lambda_.3} parent=1 // pred_check
      _
    $region19: #{_lambda_.3} parent=1 // pred_check_branch
      %24 = sbr.rel (0) target = $region21
    $region20: #{_lambda_.3} parent=1 // pred_region
      _
    $region21: #{_lambda_.3} parent=1 // pred_fallthru
      _
    // Predicated region
    $region22: #{_lambda_.3} parent=1 // pred_check
      _
    $region23: #{_lambda_.3} parent=1 // pred_check_branch
      %26 = sbr.rel (0) target = $region25
    $region24: #{_lambda_.3} parent=1 // pred_region
      _
    $region25: #{_lambda_.3} parent=1 // pred_fallthru
      _
    // Predicated region
    $region26: #{_lambda_.3} parent=1 // pred_check
      _
    $region27: #{_lambda_.3} parent=1 // pred_check_branch
      %28 = sbr.rel (0) target = $region29
    $region28: #{_lambda_.3} parent=1 // pred_region
      _
    $region29: #{_lambda_.3} parent=1 // pred_fallthru
      _
    // Predicated region
    $region30: #{_lambda_.3} parent=1 // pred_check
      _
    $region31: #{_lambda_.3} parent=1 // pred_check_branch
      %30 = sbr.rel (0) target = $region33
    $region32: #{_lambda_.3} parent=1 // pred_region
      _
    $region33: #{_lambda_.3} parent=1 // pred_fallthru
      _
    // Predicated region
    $region34: #{_lambda_.3} parent=1 // pred_check
      _
    $region35: #{_lambda_.3} parent=1 // pred_check_branch
      %32 = sbr.rel (0) target = $region37
    $region36: #{_lambda_.3} parent=1 // pred_region
      _
    $region37: #{_lambda_.3} parent=1 // pred_fallthru
      _
    %v34 = vld [vmem:[%s0] sm:$0x3]
    %v35 = vld [vmem:[%s0 + $0x2] sm:$0x3]
    %v36 = vld [vmem:[%s0 + $0x4] sm:$0x3]
    %v37 = vld [vmem:[%s0 + $0x8] sm:$0x3]
    %v38 = vld [vmem:[%s0 + $0xa] sm:$0x3]
    %v39 = vld [vmem:[%s0 + $0xc] sm:$0x3]
    %v46 = vrot.slane %v34, 1
    %v47 = vrot.slane %v34, 2
    %v48 = vrot.slane %v34, 3
    %v49 = vrot.slane %v35, 1
    %v50 = vrot.slane %v35, 2
    %v51 = vrot.slane %v35, 3
    %v52 = vrot.slane %v36, 1
    %v53 = vrot.slane %v36, 2
    %v54 = vrot.slane %v36, 3
    %v55 = vrot.slane %v37, 1
    %v56 = vrot.slane %v37, 2
    %v57 = vrot.slane %v37, 3
    %v58 = vrot.slane %v38, 1
    %v59 = vrot.slane %v38, 2
    %v60 = vrot.slane %v38, 3
    %v61 = vrot.slane %v39, 1
    %v62 = vrot.slane %v39, 2
    %v63 = vrot.slane %v39, 3
    %vm64 = vcmask 1040384
    %v67 = vsel %vm64, %v34, %v46
    %vm68 = vcmask 1042434
    %v71 = vsel %vm68, %v47, %v48
    %vm72 = vcmask 1041408
    %v73 = vsel %vm72, %v67, %v71
    %vm75 = vcmask 1041409
    %v76 = vsel %vm75, %v34, %v46
    %vm77 = vcmask 1043459
    %v78 = vsel %vm77, %v47, %v48
    %vm79 = vcmask 1042433
    %v80 = vsel %vm79, %v76, %v78
    %v82 = vrot.slane %v80, 1
    %v85 = vsel %vm64, %v35, %v49
    %v88 = vsel %vm68, %v50, %v51
    %v89 = vsel %vm72, %v85, %v88
    %v91 = vsel %vm75, %v35, %v49
    %v92 = vsel %vm77, %v50, %v51
    %v93 = vsel %vm79, %v91, %v92
    %v95 = vrot.slane %v93, 1
    %v98 = vsel %vm64, %v36, %v52
    %v101 = vsel %vm68, %v53, %v54
    %v102 = vsel %vm72, %v98, %v101
    %v104 = vsel %vm75, %v36, %v52
    %v105 = vsel %vm77, %v53, %v54
    %v106 = vsel %vm79, %v104, %v105
    %v108 = vrot.slane %v106, 1
    %v111 = vsel %vm64, %v37, %v55
    %v114 = vsel %vm68, %v56, %v57
    %v115 = vsel %vm72, %v111, %v114
    %v117 = vsel %vm75, %v37, %v55
    %v118 = vsel %vm77, %v56, %v57
    %v119 = vsel %vm79, %v117, %v118
    %v121 = vrot.slane %v119, 1
    %v124 = vsel %vm64, %v38, %v58
    %v127 = vsel %vm68, %v59, %v60
    %v128 = vsel %vm72, %v124, %v127
    %v130 = vsel %vm75, %v38, %v58
    %v131 = vsel %vm77, %v59, %v60
    %v132 = vsel %vm79, %v130, %v131
    %v134 = vrot.slane %v132, 1
    %v137 = vsel %vm64, %v39, %v61
    %v140 = vsel %vm68, %v62, %v63
    %v141 = vsel %vm72, %v137, %v140
    %v143 = vsel %vm75, %v39, %v61
    %v144 = vsel %vm77, %v62, %v63
    %v145 = vsel %vm79, %v143, %v144
    %v147 = vrot.slane %v145, 1
    %v148 = vunpack.i.l.s16 %v73
    %v149 = vunpack.i.h.s16 %v73
    %v150 = vunpack.i.l.s16 %v82
    %v151 = vunpack.i.l.s16 %v89
    %v152 = vunpack.i.h.s16 %v89
    %v153 = vunpack.i.l.s16 %v95
    %v154 = vunpack.i.l.s16 %v102
    %v155 = vunpack.i.h.s16 %v102
    %v156 = vunpack.i.l.s16 %v108
    %v157 = vunpack.i.l.s16 %v115
    %v158 = vunpack.i.h.s16 %v115
    %v159 = vunpack.i.l.s16 %v121
    %v160 = vunpack.i.l.s16 %v128
    %v161 = vunpack.i.h.s16 %v128
    %v162 = vunpack.i.l.s16 %v134
    %v163 = vunpack.i.l.s16 %v141
    %v164 = vunpack.i.h.s16 %v141
    %v165 = vunpack.i.l.s16 %v147
    %v166 = vld [vmem:[%s1] sm:$0xf]
    %v167 = vld [vmem:[%s1 + $0x4] sm:$0xf]
    %v168 = vld [vmem:[%s1 + $0x8] sm:$0xf]
    %v169 = vld [vmem:[%s1 + $0xc] sm:$0xf]
    %v170 = vld [vmem:[%s1 + $0x10] sm:$0xf]
    %v171 = vld [vmem:[%s1 + $0x14] sm:$0xf]
    %v172 = vld [vmem:[%s1 + $0x18] sm:$0xf]
    %v173 = vld [vmem:[%s1 + $0x1c] sm:$0xf]
    %v174 = vld [vmem:[%s1 + $0x20] sm:$0xf]
    %v175 = vld [vmem:[%s1 + $0x24] sm:$0xf]
    %v176 = vld [vmem:[%s1 + $0x28] sm:$0xf]
    %v177 = vld [vmem:[%s1 + $0x2c] sm:$0xf]
    %v178 = vld [vmem:[%s1 + $0x30] sm:$0xf]
    %v179 = vld [vmem:[%s1 + $0x34] sm:$0xf]
    %v180 = vld [vmem:[%s1 + $0x38] sm:$0xf]
    %v181 = vld [vmem:[%s1 + $0x3c] sm:$0xf]
    %v182 = vunpack.i.h.s16 %v82
    %v183 = vunpack.i.h.s16 %v95
    %v184 = vunpack.i.h.s16 %v108
    %v185 = vunpack.i.h.s16 %v121
    %v186 = vunpack.i.h.s16 %v134
    %v187 = vunpack.i.h.s16 %v147
    %s188 = scalar_lea.vmem %s1, 64
    %v189 = vld [vmem:[%s188] sm:$0xf]
    %v190 = vld [vmem:[%s188 + $0x4] sm:$0xf]
    %v191 = vld [vmem:[%s188 + $0x8] sm:$0xf]
    %v192 = vld [vmem:[%s188 + $0xc] sm:$0xf]
    %v193 = vld [vmem:[%s188 + $0x10] sm:$0xf]
    %v194 = vld [vmem:[%s188 + $0x14] sm:$0xf]
    %v195 = vld [vmem:[%s188 + $0x18] sm:$0xf]
    %v196 = vld [vmem:[%s188 + $0x1c] sm:$0xf]
    %v197 = vld [vmem:[%s188 + $0x20] sm:$0xf]
    %v198 = vld [vmem:[%s188 + $0x24] sm:$0xf]
    %v199 = vld [vmem:[%s188 + $0x28] sm:$0xf]
    %v200 = vld [vmem:[%s188 + $0x2c] sm:$0xf]
    %v201 = vld [vmem:[%s188 + $0x30] sm:$0xf]
    %v202 = vld [vmem:[%s188 + $0x34] sm:$0xf]
    %v203 = vld [vmem:[%s188 + $0x38] sm:$0xf]
    %v204 = vld [vmem:[%s188 + $0x3c] sm:$0xf]
    %v205 = vpack.i.b16 %v150, %v149
    %v206 = vpack.i.b16 %v152, %v182
    %v207 = vpack.i.b16 %v183, %v153
    %v208 = vpack.i.b16 %v156, %v155
    %v209 = vpack.i.b16 %v158, %v184
    %v210 = vpack.i.b16 %v185, %v159
    %v211 = vpack.i.b16 %v162, %v161
    %v212 = vpack.i.b16 %v164, %v186
    %v213 = vpack.i.b16 %v187, %v165
    %215 = vst [vmem:[#allocation1] ss:$9 sm:$0xff] %v205
    %s217 = scalar_lea.vmem [#allocation1], 1
    %218 = vst [vmem:[%s217] ss:$9 sm:$0xff] %v206
    %s220 = scalar_lea.vmem [#allocation1], 2
    %221 = vst [vmem:[%s220] ss:$9 sm:$0xff] %v207
    %s223 = scalar_lea.vmem [#allocation1], 3
    %224 = vst [vmem:[%s223] ss:$9 sm:$0xff] %v208
    %s226 = scalar_lea.vmem [#allocation1], 4
    %227 = vst [vmem:[%s226] ss:$9 sm:$0xff] %v209
    %s229 = scalar_lea.vmem [#allocation1], 5
    %230 = vst [vmem:[%s229] ss:$9 sm:$0xff] %v210
    %s232 = scalar_lea.vmem [#allocation1], 6
    %233 = vst [vmem:[%s232] ss:$9 sm:$0xff] %v211
    %s235 = scalar_lea.vmem [#allocation1], 7
    %236 = vst [vmem:[%s235] ss:$9 sm:$0xff] %v212
    %v237 = vld [vmem:[#allocation1] sm:$0xff]
    %239 = vst [vmem:[#allocation1] ss:$9 sm:$0xff] %v213
    %v240 = vld [vmem:[#allocation1] sm:$0xff]
    %v259 = vunpack.c.l.b16 %v189
    %v260 = vunpack.c.l.b16 %v190
    %v261 = vunpack.c.l.b16 %v191
    %v262 = vunpack.c.l.b16 %v192
    %v263 = vunpack.c.l.b16 %v193
    %v264 = vunpack.c.l.b16 %v194
    %v265 = vunpack.c.l.b16 %v195
    %v266 = vunpack.c.l.b16 %v196
    %v267 = vunpack.c.l.b16 %v197
    %v268 = vunpack.c.l.b16 %v198
    %v269 = vunpack.c.l.b16 %v199
    %v270 = vunpack.c.l.b16 %v200
    %v271 = vunpack.c.l.b16 %v201
    %v272 = vunpack.c.l.b16 %v202
    %v273 = vunpack.c.l.b16 %v203
    %v274 = vunpack.c.l.b16 %v204
    %v275 = vpack.c.b16 %v260, %v259
    %v276 = vpack.c.b16 %v262, %v261
    %v277 = vpack.c.b16 %v264, %v263
    %v278 = vpack.c.b16 %v266, %v265
    %v279 = vpack.c.b16 %v268, %v267
    %v280 = vpack.c.b16 %v270, %v269
    %v281 = vpack.c.b16 %v272, %v271
    %v282 = vpack.c.b16 %v274, %v273
    %291 = vmatpush.bf16.msra.mxu0 %v282
    %292 = vmatpush.bf16.msra.mxu0 %v281
    %293 = vmatpush.bf16.msra.mxu0 %v280
    %294 = vmatpush.bf16.msra.mxu0 %v279
    %295 = vmatpush.bf16.msra.mxu0 %v278
    %296 = vmatpush.bf16.msra.mxu0 %v277
    %297 = vmatpush.bf16.msra.mxu0 %v276
    %298 = vmatpush.bf16.msra.mxu0 %v275
    %299 = vmatmul.bf16.gmra.mxu0 %v237
    %v300 = vpop.f32.mrf.mxu0
    %v301 = vadd.f32 0.0, %v300
    %v302 = vpop.f32.mrf.mxu0
    %v303 = vadd.f32 0.0, %v302
    %304 = vmatmul.bf16.gmra.mxu0 %v240
    %v305 = vpop.f32.mrf.mxu0
    %v306 = vadd.f32 0.0, %v305
    %v307 = vpop.f32.mrf.mxu0
    %308 = vdwg.mxu0
    %v309 = vpack.i.b16 %v149, %v148
    %v310 = vpack.i.b16 %v151, %v150
    %v311 = vpack.i.b16 %v153, %v152
    %v312 = vpack.i.b16 %v155, %v154
    %v313 = vpack.i.b16 %v157, %v156
    %v314 = vpack.i.b16 %v159, %v158
    %v315 = vpack.i.b16 %v161, %v160
    %v316 = vpack.i.b16 %v163, %v162
    %v317 = vpack.i.b16 %v165, %v164
    %319 = vst [vmem:[#allocation1] ss:$9 sm:$0xff] %v309
    %s321 = scalar_lea.vmem [#allocation1], 1
    %322 = vst [vmem:[%s321] ss:$9 sm:$0xff] %v310
    %s324 = scalar_lea.vmem [#allocation1], 2
    %325 = vst [vmem:[%s324] ss:$9 sm:$0xff] %v311
    %s327 = scalar_lea.vmem [#allocation1], 3
    %328 = vst [vmem:[%s327] ss:$9 sm:$0xff] %v312
    %s330 = scalar_lea.vmem [#allocation1], 4
    %331 = vst [vmem:[%s330] ss:$9 sm:$0xff] %v313
    %s333 = scalar_lea.vmem [#allocation1], 5
    %334 = vst [vmem:[%s333] ss:$9 sm:$0xff] %v314
    %s336 = scalar_lea.vmem [#allocation1], 6
    %337 = vst [vmem:[%s336] ss:$9 sm:$0xff] %v315
    %s339 = scalar_lea.vmem [#allocation1], 7
    %340 = vst [vmem:[%s339] ss:$9 sm:$0xff] %v316
    %v341 = vld [vmem:[#allocation1] sm:$0xff]
    %343 = vst [vmem:[#allocation1] ss:$9 sm:$0xff] %v317
    %v344 = vld [vmem:[#allocation1] sm:$0xff]
    %v363 = vunpack.c.l.b16 %v166
    %v364 = vunpack.c.l.b16 %v167
    %v365 = vunpack.c.l.b16 %v168
    %v366 = vunpack.c.l.b16 %v169
    %v367 = vunpack.c.l.b16 %v170
    %v368 = vunpack.c.l.b16 %v171
    %v369 = vunpack.c.l.b16 %v172
    %v370 = vunpack.c.l.b16 %v173
    %v371 = vunpack.c.l.b16 %v174
    %v372 = vunpack.c.l.b16 %v175
    %v373 = vunpack.c.l.b16 %v176
    %v374 = vunpack.c.l.b16 %v177
    %v375 = vunpack.c.l.b16 %v178
    %v376 = vunpack.c.l.b16 %v179
    %v377 = vunpack.c.l.b16 %v180
    %v378 = vunpack.c.l.b16 %v181
    %v379 = vpack.c.b16 %v364, %v363
    %v380 = vpack.c.b16 %v366, %v365
    %v381 = vpack.c.b16 %v368, %v367
    %v382 = vpack.c.b16 %v370, %v369
    %v383 = vpack.c.b16 %v372, %v371
    %v384 = vpack.c.b16 %v374, %v373
    %v385 = vpack.c.b16 %v376, %v375
    %v386 = vpack.c.b16 %v378, %v377
    %395 = vmatpush.bf16.msra.mxu0 %v386
    %396 = vmatpush.bf16.msra.mxu0 %v385
    %397 = vmatpush.bf16.msra.mxu0 %v384
    %398 = vmatpush.bf16.msra.mxu0 %v383
    %399 = vmatpush.bf16.msra.mxu0 %v382
    %400 = vmatpush.bf16.msra.mxu0 %v381
    %401 = vmatpush.bf16.msra.mxu0 %v380
    %402 = vmatpush.bf16.msra.mxu0 %v379
    %403 = vmatmul.bf16.gmra.mxu0 %v341
    %v404 = vpop.f32.mrf.mxu0
    %v405 = vadd.f32 %v301, %v404
    %v406 = vpop.f32.mrf.mxu0
    %v407 = vadd.f32 %v303, %v406
    %408 = vmatmul.bf16.gmra.mxu0 %v344
    %v409 = vpop.f32.mrf.mxu0
    %v410 = vadd.f32 %v306, %v409
    %v411 = vpop.f32.mrf.mxu0
    %412 = vdwg.mxu0
    %s413 = scalar_lea.vmem %s0, 2
    %v414 = vld [vmem:[%s413] sm:$0x3]
    %v415 = vld [vmem:[%s413 + $0x2] sm:$0x3]
    %v416 = vld [vmem:[%s413 + $0x4] sm:$0x3]
    %v417 = vld [vmem:[%s413 + $0x8] sm:$0x3]
    %v418 = vld [vmem:[%s413 + $0xa] sm:$0x3]
    %v419 = vld [vmem:[%s413 + $0xc] sm:$0x3]
    %v426 = vrot.slane %v414, 1
    %v427 = vrot.slane %v414, 2
    %v428 = vrot.slane %v414, 3
    %v429 = vrot.slane %v415, 1
    %v430 = vrot.slane %v415, 2
    %v431 = vrot.slane %v415, 3
    %v432 = vrot.slane %v416, 1
    %v433 = vrot.slane %v416, 2
    %v434 = vrot.slane %v416, 3
    %v435 = vrot.slane %v417, 1
    %v436 = vrot.slane %v417, 2
    %v437 = vrot.slane %v417, 3
    %v438 = vrot.slane %v418, 1
    %v439 = vrot.slane %v418, 2
    %v440 = vrot.slane %v418, 3
    %v441 = vrot.slane %v419, 1
    %v442 = vrot.slane %v419, 2
    %v443 = vrot.slane %v419, 3
    %v446 = vsel %vm64, %v414, %v426
    %v449 = vsel %vm68, %v427, %v428
    %v450 = vsel %vm72, %v446, %v449
    %v452 = vsel %vm75, %v414, %v426
    %v453 = vsel %vm77, %v427, %v428
    %v454 = vsel %vm79, %v452, %v453
    %v456 = vrot.slane %v454, 1
    %v459 = vsel %vm64, %v415, %v429
    %v462 = vsel %vm68, %v430, %v431
    %v463 = vsel %vm72, %v459, %v462
    %v465 = vsel %vm75, %v415, %v429
    %v466 = vsel %vm77, %v430, %v431
    %v467 = vsel %vm79, %v465, %v466
    %v469 = vrot.slane %v467, 1
    %v472 = vsel %vm64, %v416, %v432
    %v475 = vsel %vm68, %v433, %v434
    %v476 = vsel %vm72, %v472, %v475
    %v478 = vsel %vm75, %v416, %v432
    %v479 = vsel %vm77, %v433, %v434
    %v480 = vsel %vm79, %v478, %v479
    %v482 = vrot.slane %v480, 1
    %v485 = vsel %vm64, %v417, %v435
    %v488 = vsel %vm68, %v436, %v437
    %v489 = vsel %vm72, %v485, %v488
    %v491 = vsel %vm75, %v417, %v435
    %v492 = vsel %vm77, %v436, %v437
    %v493 = vsel %vm79, %v491, %v492
    %v495 = vrot.slane %v493, 1
    %v498 = vsel %vm64, %v418, %v438
    %v501 = vsel %vm68, %v439, %v440
    %v502 = vsel %vm72, %v498, %v501
    %v504 = vsel %vm75, %v418, %v438
    %v505 = vsel %vm77, %v439, %v440
    %v506 = vsel %vm79, %v504, %v505
    %v508 = vrot.slane %v506, 1
    %v511 = vsel %vm64, %v419, %v441
    %v514 = vsel %vm68, %v442, %v443
    %v515 = vsel %vm72, %v511, %v514
    %v517 = vsel %vm75, %v419, %v441
    %v518 = vsel %vm77, %v442, %v443
    %v519 = vsel %vm79, %v517, %v518
    %v521 = vrot.slane %v519, 1
    %v522 = vunpack.i.l.s16 %v450
    %v523 = vunpack.i.h.s16 %v450
    %v524 = vunpack.i.l.s16 %v456
    %v525 = vunpack.i.l.s16 %v463
    %v526 = vunpack.i.h.s16 %v463
    %v527 = vunpack.i.l.s16 %v469
    %v528 = vunpack.i.l.s16 %v476
    %v529 = vunpack.i.h.s16 %v476
    %v530 = vunpack.i.l.s16 %v482
    %v531 = vunpack.i.l.s16 %v489
    %v532 = vunpack.i.h.s16 %v489
    %v533 = vunpack.i.l.s16 %v495
    %v534 = vunpack.i.l.s16 %v502
    %v535 = vunpack.i.h.s16 %v502
    %v536 = vunpack.i.l.s16 %v508
    %v537 = vunpack.i.l.s16 %v515
    %v538 = vunpack.i.h.s16 %v515
    %v539 = vunpack.i.l.s16 %v521
    %s540 = scalar_lea.vmem %s1, 128
    %v541 = vld [vmem:[%s540] sm:$0xf]
    %v542 = vld [vmem:[%s540 + $0x4] sm:$0xf]
    %v543 = vld [vmem:[%s540 + $0x8] sm:$0xf]
    %v544 = vld [vmem:[%s540 + $0xc] sm:$0xf]
    %v545 = vld [vmem:[%s540 + $0x10] sm:$0xf]
    %v546 = vld [vmem:[%s540 + $0x14] sm:$0xf]
    %v547 = vld [vmem:[%s540 + $0x18] sm:$0xf]
    %v548 = vld [vmem:[%s540 + $0x1c] sm:$0xf]
    %v549 = vld [vmem:[%s540 + $0x20] sm:$0xf]
    %v550 = vld [vmem:[%s540 + $0x24] sm:$0xf]
    %v551 = vld [vmem:[%s540 + $0x28] sm:$0xf]
    %v552 = vld [vmem:[%s540 + $0x2c] sm:$0xf]
    %v553 = vld [vmem:[%s540 + $0x30] sm:$0xf]
    %v554 = vld [vmem:[%s540 + $0x34] sm:$0xf]
    %v555 = vld [vmem:[%s540 + $0x38] sm:$0xf]
    %v556 = vld [vmem:[%s540 + $0x3c] sm:$0xf]
    %v557 = vpack.i.b16 %v523, %v522
    %v558 = vpack.i.b16 %v525, %v524
    %v559 = vpack.i.b16 %v527, %v526
    %v560 = vpack.i.b16 %v529, %v528
    %v561 = vpack.i.b16 %v531, %v530
    %v562 = vpack.i.b16 %v533, %v532
    %v563 = vpack.i.b16 %v535, %v534
    %v564 = vpack.i.b16 %v537, %v536
    %v565 = vpack.i.b16 %v539, %v538
    %567 = vst [vmem:[#allocation1] ss:$9 sm:$0xff] %v557
    %s569 = scalar_lea.vmem [#allocation1], 1
    %570 = vst [vmem:[%s569] ss:$9 sm:$0xff] %v558
    %s572 = scalar_lea.vmem [#allocation1], 2
    %573 = vst [vmem:[%s572] ss:$9 sm:$0xff] %v559
    %s575 = scalar_lea.vmem [#allocation1], 3
    %576 = vst [vmem:[%s575] ss:$9 sm:$0xff] %v560
    %s578 = scalar_lea.vmem [#allocation1], 4
    %579 = vst [vmem:[%s578] ss:$9 sm:$0xff] %v561
    %s581 = scalar_lea.vmem [#allocation1], 5
    %582 = vst [vmem:[%s581] ss:$9 sm:$0xff] %v562
    %s584 = scalar_lea.vmem [#allocation1], 6
    %585 = vst [vmem:[%s584] ss:$9 sm:$0xff] %v563
    %s587 = scalar_lea.vmem [#allocation1], 7
    %588 = vst [vmem:[%s587] ss:$9 sm:$0xff] %v564
    %v589 = vld [vmem:[#allocation1] sm:$0xff]
    %591 = vst [vmem:[#allocation1] ss:$9 sm:$0xff] %v565
    %v592 = vld [vmem:[#allocation1] sm:$0xff]
    %v611 = vunpack.c.l.b16 %v541
    %v612 = vunpack.c.l.b16 %v542
    %v613 = vunpack.c.l.b16 %v543
    %v614 = vunpack.c.l.b16 %v544
    %v615 = vunpack.c.l.b16 %v545
    %v616 = vunpack.c.l.b16 %v546
    %v617 = vunpack.c.l.b16 %v547
    %v618 = vunpack.c.l.b16 %v548
    %v619 = vunpack.c.l.b16 %v549
    %v620 = vunpack.c.l.b16 %v550
    %v621 = vunpack.c.l.b16 %v551
    %v622 = vunpack.c.l.b16 %v552
    %v623 = vunpack.c.l.b16 %v553
    %v624 = vunpack.c.l.b16 %v554
    %v625 = vunpack.c.l.b16 %v555
    %v626 = vunpack.c.l.b16 %v556
    %v627 = vpack.c.b16 %v612, %v611
    %v628 = vpack.c.b16 %v614, %v613
    %v629 = vpack.c.b16 %v616, %v615
    %v630 = vpack.c.b16 %v618, %v617
    %v631 = vpack.c.b16 %v620, %v619
    %v632 = vpack.c.b16 %v622, %v621
    %v633 = vpack.c.b16 %v624, %v623
    %v634 = vpack.c.b16 %v626, %v625
    %643 = vmatpush.bf16.msra.mxu0 %v634
    %644 = vmatpush.bf16.msra.mxu0 %v633
    %645 = vmatpush.bf16.msra.mxu0 %v632
    %646 = vmatpush.bf16.msra.mxu0 %v631
    %647 = vmatpush.bf16.msra.mxu0 %v630
    %648 = vmatpush.bf16.msra.mxu0 %v629
    %649 = vmatpush.bf16.msra.mxu0 %v628
    %650 = vmatpush.bf16.msra.mxu0 %v627
    %651 = vmatmul.bf16.gmra.mxu0 %v589
    %v652 = vpop.f32.mrf.mxu0
    %v653 = vadd.f32 0.0, %v652
    %v654 = vpop.f32.mrf.mxu0
    %v655 = vadd.f32 0.0, %v654
    %656 = vmatmul.bf16.gmra.mxu0 %v592
    %v657 = vpop.f32.mrf.mxu0
    %v658 = vadd.f32 0.0, %v657
    %v659 = vpop.f32.mrf.mxu0
    %660 = vdwg.mxu0
    %v661 = vadd.f32 %v405, %v653
    %v662 = vadd.f32 %v407, %v655
    %v663 = vadd.f32 %v410, %v658
    %v664 = vld [vmem:[%s413] sm:$0x3]
    %v665 = vld [vmem:[%s413 + $0x2] sm:$0x3]
    %v666 = vld [vmem:[%s413 + $0x4] sm:$0x3]
    %v667 = vld [vmem:[%s413 + $0x8] sm:$0x3]
    %v668 = vld [vmem:[%s413 + $0xa] sm:$0x3]
    %v669 = vld [vmem:[%s413 + $0xc] sm:$0x3]
    %v676 = vrot.slane %v664, 1
    %v677 = vrot.slane %v664, 2
    %v678 = vrot.slane %v664, 3
    %v679 = vrot.slane %v665, 1
    %v680 = vrot.slane %v665, 2
    %v681 = vrot.slane %v665, 3
    %v682 = vrot.slane %v666, 1
    %v683 = vrot.slane %v666, 2
    %v684 = vrot.slane %v666, 3
    %v685 = vrot.slane %v667, 1
    %v686 = vrot.slane %v667, 2
    %v687 = vrot.slane %v667, 3
    %v688 = vrot.slane %v668, 1
    %v689 = vrot.slane %v668, 2
    %v690 = vrot.slane %v668, 3
    %v691 = vrot.slane %v669, 1
    %v692 = vrot.slane %v669, 2
    %v693 = vrot.slane %v669, 3
    %v696 = vsel %vm64, %v664, %v676
    %v699 = vsel %vm68, %v677, %v678
    %v700 = vsel %vm72, %v696, %v699
    %v702 = vsel %vm75, %v664, %v676
    %v703 = vsel %vm77, %v677, %v678
    %v704 = vsel %vm79, %v702, %v703
    %v706 = vrot.slane %v704, 1
    %v709 = vsel %vm64, %v665, %v679
    %v712 = vsel %vm68, %v680, %v681
    %v713 = vsel %vm72, %v709, %v712
    %v715 = vsel %vm75, %v665, %v679
    %v716 = vsel %vm77, %v680, %v681
    %v717 = vsel %vm79, %v715, %v716
    %v719 = vrot.slane %v717, 1
    %v722 = vsel %vm64, %v666, %v682
    %v725 = vsel %vm68, %v683, %v684
    %v726 = vsel %vm72, %v722, %v725
    %v728 = vsel %vm75, %v666, %v682
    %v729 = vsel %vm77, %v683, %v684
    %v730 = vsel %vm79, %v728, %v729
    %v732 = vrot.slane %v730, 1
    %v735 = vsel %vm64, %v667, %v685
    %v738 = vsel %vm68, %v686, %v687
    %v739 = vsel %vm72, %v735, %v738
    %v741 = vsel %vm75, %v667, %v685
    %v742 = vsel %vm77, %v686, %v687
    %v743 = vsel %vm79, %v741, %v742
    %v745 = vrot.slane %v743, 1
    %v748 = vsel %vm64, %v668, %v688
    %v751 = vsel %vm68, %v689, %v690
    %v752 = vsel %vm72, %v748, %v751
    %v754 = vsel %vm75, %v668, %v688
    %v755 = vsel %vm77, %v689, %v690
    %v756 = vsel %vm79, %v754, %v755
    %v758 = vrot.slane %v756, 1
    %v761 = vsel %vm64, %v669, %v691
    %v764 = vsel %vm68, %v692, %v693
    %v765 = vsel %vm72, %v761, %v764
    %v767 = vsel %vm75, %v669, %v691
    %v768 = vsel %vm77, %v692, %v693
    %v769 = vsel %vm79, %v767, %v768
    %v771 = vrot.slane %v769, 1
    %v772 = vunpack.i.h.s16 %v700
    %v773 = vunpack.i.l.s16 %v706
    %v774 = vunpack.i.h.s16 %v706
    %v775 = vunpack.i.h.s16 %v713
    %v776 = vunpack.i.l.s16 %v719
    %v777 = vunpack.i.h.s16 %v719
    %v778 = vunpack.i.h.s16 %v726
    %v779 = vunpack.i.l.s16 %v732
    %v780 = vunpack.i.h.s16 %v732
    %v781 = vunpack.i.h.s16 %v739
    %v782 = vunpack.i.l.s16 %v745
    %v783 = vunpack.i.h.s16 %v745
    %v784 = vunpack.i.h.s16 %v752
    %v785 = vunpack.i.l.s16 %v758
    %v786 = vunpack.i.h.s16 %v758
    %v787 = vunpack.i.h.s16 %v765
    %v788 = vunpack.i.l.s16 %v771
    %v789 = vunpack.i.h.s16 %v771
    %s790 = scalar_lea.vmem %s1, 192
    %v791 = vld [vmem:[%s790] sm:$0xf]
    %v792 = vld [vmem:[%s790 + $0x4] sm:$0xf]
    %v793 = vld [vmem:[%s790 + $0x8] sm:$0xf]
    %v794 = vld [vmem:[%s790 + $0xc] sm:$0xf]
    %v795 = vld [vmem:[%s790 + $0x10] sm:$0xf]
    %v796 = vld [vmem:[%s790 + $0x14] sm:$0xf]
    %v797 = vld [vmem:[%s790 + $0x18] sm:$0xf]
    %v798 = vld [vmem:[%s790 + $0x1c] sm:$0xf]
    %v799 = vld [vmem:[%s790 + $0x20] sm:$0xf]
    %v800 = vld [vmem:[%s790 + $0x24] sm:$0xf]
    %v801 = vld [vmem:[%s790 + $0x28] sm:$0xf]
    %v802 = vld [vmem:[%s790 + $0x2c] sm:$0xf]
    %v803 = vld [vmem:[%s790 + $0x30] sm:$0xf]
    %v804 = vld [vmem:[%s790 + $0x34] sm:$0xf]
    %v805 = vld [vmem:[%s790 + $0x38] sm:$0xf]
    %v806 = vld [vmem:[%s790 + $0x3c] sm:$0xf]
    %v807 = vpack.i.b16 %v773, %v772
    %v808 = vpack.i.b16 %v775, %v774
    %v809 = vpack.i.b16 %v777, %v776
    %v810 = vpack.i.b16 %v779, %v778
    %v811 = vpack.i.b16 %v781, %v780
    %v812 = vpack.i.b16 %v783, %v782
    %v813 = vpack.i.b16 %v785, %v784
    %v814 = vpack.i.b16 %v787, %v786
    %v815 = vpack.i.b16 %v789, %v788
    %817 = vst [vmem:[#allocation1] ss:$9 sm:$0xff] %v807
    %s819 = scalar_lea.vmem [#allocation1], 1
    %820 = vst [vmem:[%s819] ss:$9 sm:$0xff] %v808
    %s822 = scalar_lea.vmem [#allocation1], 2
    %823 = vst [vmem:[%s822] ss:$9 sm:$0xff] %v809
    %s825 = scalar_lea.vmem [#allocation1], 3
    %826 = vst [vmem:[%s825] ss:$9 sm:$0xff] %v810
    %s828 = scalar_lea.vmem [#allocation1], 4
    %829 = vst [vmem:[%s828] ss:$9 sm:$0xff] %v811
    %s831 = scalar_lea.vmem [#allocation1], 5
    %832 = vst [vmem:[%s831] ss:$9 sm:$0xff] %v812
    %s834 = scalar_lea.vmem [#allocation1], 6
    %835 = vst [vmem:[%s834] ss:$9 sm:$0xff] %v813
    %s837 = scalar_lea.vmem [#allocation1], 7
    %838 = vst [vmem:[%s837] ss:$9 sm:$0xff] %v814
    %v839 = vld [vmem:[#allocation1] sm:$0xff]
    %841 = vst [vmem:[#allocation1] ss:$9 sm:$0xff] %v815
    %v842 = vld [vmem:[#allocation1] sm:$0xff]
    %v861 = vunpack.c.l.b16 %v791
    %v862 = vunpack.c.l.b16 %v792
    %v863 = vunpack.c.l.b16 %v793
    %v864 = vunpack.c.l.b16 %v794
    %v865 = vunpack.c.l.b16 %v795
    %v866 = vunpack.c.l.b16 %v796
    %v867 = vunpack.c.l.b16 %v797
    %v868 = vunpack.c.l.b16 %v798
    %v869 = vunpack.c.l.b16 %v799
    %v870 = vunpack.c.l.b16 %v800
    %v871 = vunpack.c.l.b16 %v801
    %v872 = vunpack.c.l.b16 %v802
    %v873 = vunpack.c.l.b16 %v803
    %v874 = vunpack.c.l.b16 %v804
    %v875 = vunpack.c.l.b16 %v805
    %v876 = vunpack.c.l.b16 %v806
    %v877 = vpack.c.b16 %v862, %v861
    %v878 = vpack.c.b16 %v864, %v863
    %v879 = vpack.c.b16 %v866, %v865
    %v880 = vpack.c.b16 %v868, %v867
    %v881 = vpack.c.b16 %v870, %v869
    %v882 = vpack.c.b16 %v872, %v871
    %v883 = vpack.c.b16 %v874, %v873
    %v884 = vpack.c.b16 %v876, %v875
    %893 = vmatpush.bf16.msra.mxu0 %v884
    %894 = vmatpush.bf16.msra.mxu0 %v883
    %895 = vmatpush.bf16.msra.mxu0 %v882
    %896 = vmatpush.bf16.msra.mxu0 %v881
    %897 = vmatpush.bf16.msra.mxu0 %v880
    %898 = vmatpush.bf16.msra.mxu0 %v879
    %899 = vmatpush.bf16.msra.mxu0 %v878
    %900 = vmatpush.bf16.msra.mxu0 %v877
    %901 = vmatmul.bf16.gmra.mxu0 %v839
    %v902 = vpop.f32.mrf.mxu0
    %v903 = vadd.f32 0.0, %v902
    %v904 = vpop.f32.mrf.mxu0
    %v905 = vadd.f32 0.0, %v904
    %906 = vmatmul.bf16.gmra.mxu0 %v842
    %v907 = vpop.f32.mrf.mxu0
    %v908 = vadd.f32 0.0, %v907
    %v909 = vpop.f32.mrf.mxu0
    %910 = vdwg.mxu0
    %v911 = vadd.f32 %v661, %v903
    %v912 = vadd.f32 %v662, %v905
    %v913 = vadd.f32 %v663, %v908
    %v914 = vld [vmem:[%s2] sm:$0x1]
    %v916 = vperm.slane %v914, 0
    %v918 = vadd.f32 %v911, %v916
    %v919 = vadd.f32 %v912, %v916
    %v920 = vadd.f32 %v913, %v916
    %v921 = vmax.f32 %v918, 0.0
    %v922 = vmax.f32 %v919, 0.0
    %v923 = vmax.f32 %v920, 0.0
    %v924 = vpack.c.bf16 %v921, %v921
    %v925 = vpack.c.bf16 %v922, %v922
    %v926 = vpack.c.bf16 %v923, %v923
    %v930 = vrot.slane %v924, 3
    %v931 = vrot.slane %v925, 3
    %v932 = vrot.slane %v926, 3
    %v935 = vsel %vm64, %v924, %v930
    %v937 = vsel %vm75, %v924, %v930
    %v939 = vrot.slane %v937, 1
    %v940 = vsel %vm68, %v924, %v930
    %v942 = vrot.slane %v940, 2
    %v943 = vsel %vm77, %v924, %v930
    %v945 = vrot.slane %v943, 3
    %v948 = vsel %vm64, %v925, %v931
    %v950 = vsel %vm75, %v925, %v931
    %v952 = vrot.slane %v950, 1
    %v953 = vsel %vm68, %v925, %v931
    %v955 = vrot.slane %v953, 2
    %v956 = vsel %vm77, %v925, %v931
    %v958 = vrot.slane %v956, 3
    %v961 = vsel %vm64, %v926, %v932
    %v963 = vunpack.i.l.s16 %v935
    %v964 = vunpack.i.h.s16 %v935
    %v965 = vunpack.i.l.s16 %v939
    %v966 = vunpack.i.h.s16 %v939
    %v967 = vunpack.i.l.s16 %v942
    %v968 = vunpack.i.h.s16 %v942
    %v969 = vunpack.i.l.s16 %v945
    %v970 = vunpack.i.h.s16 %v945
    %v971 = vunpack.i.l.s16 %v948
    %v972 = vunpack.i.h.s16 %v948
    %v973 = vunpack.i.l.s16 %v952
    %v974 = vunpack.i.h.s16 %v952
    %v975 = vunpack.i.l.s16 %v955
    %v976 = vunpack.i.h.s16 %v955
    %v977 = vunpack.i.l.s16 %v958
    %v978 = vunpack.i.h.s16 %v958
    %v979 = vunpack.i.l.s16 %v961
    %v980 = vunpack.i.h.s16 %v961
    %v981 = vld [vmem:[%s3] sm:$0xf]
    %v982 = vld [vmem:[%s3 + $0x4] sm:$0xf]
    %v983 = vld [vmem:[%s3 + $0x8] sm:$0xf]
    %v984 = vld [vmem:[%s3 + $0xc] sm:$0xf]
    %v985 = vld [vmem:[%s3 + $0x10] sm:$0xf]
    %v986 = vld [vmem:[%s3 + $0x14] sm:$0xf]
    %v987 = vld [vmem:[%s3 + $0x18] sm:$0xf]
    %v988 = vld [vmem:[%s3 + $0x1c] sm:$0xf]
    %s989 = scalar_lea.vmem %s3, 32
    %v990 = vld [vmem:[%s989] sm:$0xf]
    %v991 = vld [vmem:[%s989 + $0x4] sm:$0xf]
    %v992 = vld [vmem:[%s989 + $0x8] sm:$0xf]
    %v993 = vld [vmem:[%s989 + $0xc] sm:$0xf]
    %v994 = vld [vmem:[%s989 + $0x10] sm:$0xf]
    %v995 = vld [vmem:[%s989 + $0x14] sm:$0xf]
    %v996 = vld [vmem:[%s989 + $0x18] sm:$0xf]
    %v997 = vld [vmem:[%s989 + $0x1c] sm:$0xf]
    %v998 = vpack.i.b16 %v973, %v964
    %1000 = vst [vmem:[#allocation1] ss:$9 sm:$0xff] %v998
    %v1001 = vld [vmem:[#allocation1] sm:$0xff]
    %v1010 = vunpack.c.l.b16 %v990
    %v1011 = vunpack.c.l.b16 %v991
    %v1012 = vunpack.c.l.b16 %v992
    %v1013 = vunpack.c.l.b16 %v993
    %v1014 = vunpack.c.l.b16 %v994
    %v1015 = vunpack.c.l.b16 %v995
    %v1016 = vunpack.c.l.b16 %v996
    %v1017 = vunpack.c.l.b16 %v997
    %v1018 = vpack.c.b16 %v1011, %v1010
    %v1019 = vpack.c.b16 %v1013, %v1012
    %v1020 = vpack.c.b16 %v1015, %v1014
    %v1021 = vpack.c.b16 %v1017, %v1016
    %vm1026 = vcmask 523264
    %v1027 = vsel %vm1026, %v1001, 0
    %1029 = vmatpush.bf16.msra.mxu0 0
    %1030 = vmatpush.bf16.msra.mxu0 0
    %1031 = vmatpush.bf16.msra.mxu0 0
    %1032 = vmatpush.bf16.msra.mxu0 0
    %1033 = vmatpush.bf16.msra.mxu0 %v1021
    %1034 = vmatpush.bf16.msra.mxu0 %v1020
    %1035 = vmatpush.bf16.msra.mxu0 %v1019
    %1036 = vmatpush.bf16.msra.mxu0 %v1018
    %1037 = vmatmul.bf16.gmra.mxu0 %v1027
    %v1038 = vpop.f32.mrf.mxu0
    %v1039 = vadd.f32 0.0, %v1038
    %v1040 = vpop.f32.mrf.mxu0
    %1041 = vdwg.mxu0
    %v1042 = vpack.i.b16 %v972, %v963
    %1044 = vst [vmem:[#allocation1] ss:$9 sm:$0xff] %v1042
    %v1045 = vld [vmem:[#allocation1] sm:$0xff]
    %v1054 = vunpack.c.l.b16 %v981
    %v1055 = vunpack.c.l.b16 %v982
    %v1056 = vunpack.c.l.b16 %v983
    %v1057 = vunpack.c.l.b16 %v984
    %v1058 = vunpack.c.l.b16 %v985
    %v1059 = vunpack.c.l.b16 %v986
    %v1060 = vunpack.c.l.b16 %v987
    %v1061 = vunpack.c.l.b16 %v988
    %v1062 = vpack.c.b16 %v1055, %v1054
    %v1063 = vpack.c.b16 %v1057, %v1056
    %v1064 = vpack.c.b16 %v1059, %v1058
    %v1065 = vpack.c.b16 %v1061, %v1060
    %v1070 = vsel %vm1026, %v1045, 0
    %1072 = vmatpush.bf16.msra.mxu0 0
    %1073 = vmatpush.bf16.msra.mxu0 0
    %1074 = vmatpush.bf16.msra.mxu0 0
    %1075 = vmatpush.bf16.msra.mxu0 0
    %1076 = vmatpush.bf16.msra.mxu0 %v1065
    %1077 = vmatpush.bf16.msra.mxu0 %v1064
    %1078 = vmatpush.bf16.msra.mxu0 %v1063
    %1079 = vmatpush.bf16.msra.mxu0 %v1062
    %1080 = vmatmul.bf16.gmra.mxu0 %v1070
    %v1081 = vpop.f32.mrf.mxu0
    %v1082 = vadd.f32 %v1039, %v1081
    %v1083 = vpop.f32.mrf.mxu0
    %1084 = vdwg.mxu0
    %s1085 = scalar_lea.vmem %s3, 64
    %v1086 = vld [vmem:[%s1085] sm:$0xf]
    %v1087 = vld [vmem:[%s1085 + $0x4] sm:$0xf]
    %v1088 = vld [vmem:[%s1085 + $0x8] sm:$0xf]
    %v1089 = vld [vmem:[%s1085 + $0xc] sm:$0xf]
    %v1090 = vld [vmem:[%s1085 + $0x10] sm:$0xf]
    %v1091 = vld [vmem:[%s1085 + $0x14] sm:$0xf]
    %v1092 = vld [vmem:[%s1085 + $0x18] sm:$0xf]
    %v1093 = vld [vmem:[%s1085 + $0x1c] sm:$0xf]
    %v1094 = vpack.i.b16 %v974, %v965
    %1096 = vst [vmem:[#allocation1] ss:$9 sm:$0xff] %v1094
    %v1097 = vld [vmem:[#allocation1] sm:$0xff]
    %v1106 = vunpack.c.l.b16 %v1086
    %v1107 = vunpack.c.l.b16 %v1087
    %v1108 = vunpack.c.l.b16 %v1088
    %v1109 = vunpack.c.l.b16 %v1089
    %v1110 = vunpack.c.l.b16 %v1090
    %v1111 = vunpack.c.l.b16 %v1091
    %v1112 = vunpack.c.l.b16 %v1092
    %v1113 = vunpack.c.l.b16 %v1093
    %v1114 = vpack.c.b16 %v1107, %v1106
    %v1115 = vpack.c.b16 %v1109, %v1108
    %v1116 = vpack.c.b16 %v1111, %v1110
    %v1117 = vpack.c.b16 %v1113, %v1112
    %v1122 = vsel %vm1026, %v1097, 0
    %1124 = vmatpush.bf16.msra.mxu0 0
    %1125 = vmatpush.bf16.msra.mxu0 0
    %1126 = vmatpush.bf16.msra.mxu0 0
    %1127 = vmatpush.bf16.msra.mxu0 0
    %1128 = vmatpush.bf16.msra.mxu0 %v1117
    %1129 = vmatpush.bf16.msra.mxu0 %v1116
    %1130 = vmatpush.bf16.msra.mxu0 %v1115
    %1131 = vmatpush.bf16.msra.mxu0 %v1114
    %1132 = vmatmul.bf16.gmra.mxu0 %v1122
    %v1133 = vpop.f32.mrf.mxu0
    %v1134 = vadd.f32 0.0, %v1133
    %v1135 = vpop.f32.mrf.mxu0
    %1136 = vdwg.mxu0
    %v1137 = vadd.f32 %v1082, %v1134
    %s1138 = scalar_lea.vmem %s3, 96
    %v1139 = vld [vmem:[%s1138] sm:$0xf]
    %v1140 = vld [vmem:[%s1138 + $0x4] sm:$0xf]
    %v1141 = vld [vmem:[%s1138 + $0x8] sm:$0xf]
    %v1142 = vld [vmem:[%s1138 + $0xc] sm:$0xf]
    %v1143 = vld [vmem:[%s1138 + $0x10] sm:$0xf]
    %v1144 = vld [vmem:[%s1138 + $0x14] sm:$0xf]
    %v1145 = vld [vmem:[%s1138 + $0x18] sm:$0xf]
    %v1146 = vld [vmem:[%s1138 + $0x1c] sm:$0xf]
    %v1147 = vpack.i.b16 %v975, %v966
    %1149 = vst [vmem:[#allocation1] ss:$9 sm:$0xff] %v1147
    %v1150 = vld [vmem:[#allocation1] sm:$0xff]
    %v1159 = vunpack.c.l.b16 %v1139
    %v1160 = vunpack.c.l.b16 %v1140
    %v1161 = vunpack.c.l.b16 %v1141
    %v1162 = vunpack.c.l.b16 %v1142
    %v1163 = vunpack.c.l.b16 %v1143
    %v1164 = vunpack.c.l.b16 %v1144
    %v1165 = vunpack.c.l.b16 %v1145
    %v1166 = vunpack.c.l.b16 %v1146
    %v1167 = vpack.c.b16 %v1160, %v1159
    %v1168 = vpack.c.b16 %v1162, %v1161
    %v1169 = vpack.c.b16 %v1164, %v1163
    %v1170 = vpack.c.b16 %v1166, %v1165
    %v1175 = vsel %vm1026, %v1150, 0
    %1177 = vmatpush.bf16.msra.mxu0 0
    %1178 = vmatpush.bf16.msra.mxu0 0
    %1179 = vmatpush.bf16.msra.mxu0 0
    %1180 = vmatpush.bf16.msra.mxu0 0
    %1181 = vmatpush.bf16.msra.mxu0 %v1170
    %1182 = vmatpush.bf16.msra.mxu0 %v1169
    %1183 = vmatpush.bf16.msra.mxu0 %v1168
    %1184 = vmatpush.bf16.msra.mxu0 %v1167
    %1185 = vmatmul.bf16.gmra.mxu0 %v1175
    %v1186 = vpop.f32.mrf.mxu0
    %v1187 = vadd.f32 0.0, %v1186
    %v1188 = vpop.f32.mrf.mxu0
    %1189 = vdwg.mxu0
    %v1190 = vadd.f32 %v1137, %v1187
    %s1191 = scalar_lea.vmem %s3, 128
    %v1192 = vld [vmem:[%s1191] sm:$0xf]
    %v1193 = vld [vmem:[%s1191 + $0x4] sm:$0xf]
    %v1194 = vld [vmem:[%s1191 + $0x8] sm:$0xf]
    %v1195 = vld [vmem:[%s1191 + $0xc] sm:$0xf]
    %v1196 = vld [vmem:[%s1191 + $0x10] sm:$0xf]
    %v1197 = vld [vmem:[%s1191 + $0x14] sm:$0xf]
    %v1198 = vld [vmem:[%s1191 + $0x18] sm:$0xf]
    %v1199 = vld [vmem:[%s1191 + $0x1c] sm:$0xf]
    %v1200 = vpack.i.b16 %v976, %v967
    %1202 = vst [vmem:[#allocation1] ss:$9 sm:$0xff] %v1200
    %v1203 = vld [vmem:[#allocation1] sm:$0xff]
    %v1212 = vunpack.c.l.b16 %v1192
    %v1213 = vunpack.c.l.b16 %v1193
    %v1214 = vunpack.c.l.b16 %v1194
    %v1215 = vunpack.c.l.b16 %v1195
    %v1216 = vunpack.c.l.b16 %v1196
    %v1217 = vunpack.c.l.b16 %v1197
    %v1218 = vunpack.c.l.b16 %v1198
    %v1219 = vunpack.c.l.b16 %v1199
    %v1220 = vpack.c.b16 %v1213, %v1212
    %v1221 = vpack.c.b16 %v1215, %v1214
    %v1222 = vpack.c.b16 %v1217, %v1216
    %v1223 = vpack.c.b16 %v1219, %v1218
    %v1228 = vsel %vm1026, %v1203, 0
    %1230 = vmatpush.bf16.msra.mxu0 0
    %1231 = vmatpush.bf16.msra.mxu0 0
    %1232 = vmatpush.bf16.msra.mxu0 0
    %1233 = vmatpush.bf16.msra.mxu0 0
    %1234 = vmatpush.bf16.msra.mxu0 %v1223
    %1235 = vmatpush.bf16.msra.mxu0 %v1222
    %1236 = vmatpush.bf16.msra.mxu0 %v1221
    %1237 = vmatpush.bf16.msra.mxu0 %v1220
    %1238 = vmatmul.bf16.gmra.mxu0 %v1228
    %v1239 = vpop.f32.mrf.mxu0
    %v1240 = vadd.f32 0.0, %v1239
    %v1241 = vpop.f32.mrf.mxu0
    %1242 = vdwg.mxu0
    %v1243 = vadd.f32 %v1190, %v1240
    %s1244 = scalar_lea.vmem %s3, 160
    %v1245 = vld [vmem:[%s1244] sm:$0xf]
    %v1246 = vld [vmem:[%s1244 + $0x4] sm:$0xf]
    %v1247 = vld [vmem:[%s1244 + $0x8] sm:$0xf]
    %v1248 = vld [vmem:[%s1244 + $0xc] sm:$0xf]
    %v1249 = vld [vmem:[%s1244 + $0x10] sm:$0xf]
    %v1250 = vld [vmem:[%s1244 + $0x14] sm:$0xf]
    %v1251 = vld [vmem:[%s1244 + $0x18] sm:$0xf]
    %v1252 = vld [vmem:[%s1244 + $0x1c] sm:$0xf]
    %v1253 = vpack.i.b16 %v977, %v968
    %1255 = vst [vmem:[#allocation1] ss:$9 sm:$0xff] %v1253
    %v1256 = vld [vmem:[#allocation1] sm:$0xff]
    %v1265 = vunpack.c.l.b16 %v1245
    %v1266 = vunpack.c.l.b16 %v1246
    %v1267 = vunpack.c.l.b16 %v1247
    %v1268 = vunpack.c.l.b16 %v1248
    %v1269 = vunpack.c.l.b16 %v1249
    %v1270 = vunpack.c.l.b16 %v1250
    %v1271 = vunpack.c.l.b16 %v1251
    %v1272 = vunpack.c.l.b16 %v1252
    %v1273 = vpack.c.b16 %v1266, %v1265
    %v1274 = vpack.c.b16 %v1268, %v1267
    %v1275 = vpack.c.b16 %v1270, %v1269
    %v1276 = vpack.c.b16 %v1272, %v1271
    %v1281 = vsel %vm1026, %v1256, 0
    %1283 = vmatpush.bf16.msra.mxu0 0
    %1284 = vmatpush.bf16.msra.mxu0 0
    %1285 = vmatpush.bf16.msra.mxu0 0
    %1286 = vmatpush.bf16.msra.mxu0 0
    %1287 = vmatpush.bf16.msra.mxu0 %v1276
    %1288 = vmatpush.bf16.msra.mxu0 %v1275
    %1289 = vmatpush.bf16.msra.mxu0 %v1274
    %1290 = vmatpush.bf16.msra.mxu0 %v1273
    %1291 = vmatmul.bf16.gmra.mxu0 %v1281
    %v1292 = vpop.f32.mrf.mxu0
    %v1293 = vadd.f32 0.0, %v1292
    %v1294 = vpop.f32.mrf.mxu0
    %1295 = vdwg.mxu0
    %v1296 = vadd.f32 %v1243, %v1293
    %s1297 = scalar_lea.vmem %s3, 192
    %v1298 = vld [vmem:[%s1297] sm:$0xf]
    %v1299 = vld [vmem:[%s1297 + $0x4] sm:$0xf]
    %v1300 = vld [vmem:[%s1297 + $0x8] sm:$0xf]
    %v1301 = vld [vmem:[%s1297 + $0xc] sm:$0xf]
    %v1302 = vld [vmem:[%s1297 + $0x10] sm:$0xf]
    %v1303 = vld [vmem:[%s1297 + $0x14] sm:$0xf]
    %v1304 = vld [vmem:[%s1297 + $0x18] sm:$0xf]
    %v1305 = vld [vmem:[%s1297 + $0x1c] sm:$0xf]
    %v1306 = vpack.i.b16 %v978, %v969
    %1308 = vst [vmem:[#allocation1] ss:$9 sm:$0xff] %v1306
    %v1309 = vld [vmem:[#allocation1] sm:$0xff]
    %v1318 = vunpack.c.l.b16 %v1298
    %v1319 = vunpack.c.l.b16 %v1299
    %v1320 = vunpack.c.l.b16 %v1300
    %v1321 = vunpack.c.l.b16 %v1301
    %v1322 = vunpack.c.l.b16 %v1302
    %v1323 = vunpack.c.l.b16 %v1303
    %v1324 = vunpack.c.l.b16 %v1304
    %v1325 = vunpack.c.l.b16 %v1305
    %v1326 = vpack.c.b16 %v1319, %v1318
    %v1327 = vpack.c.b16 %v1321, %v1320
    %v1328 = vpack.c.b16 %v1323, %v1322
    %v1329 = vpack.c.b16 %v1325, %v1324
    %v1334 = vsel %vm1026, %v1309, 0
    %1336 = vmatpush.bf16.msra.mxu0 0
    %1337 = vmatpush.bf16.msra.mxu0 0
    %1338 = vmatpush.bf16.msra.mxu0 0
    %1339 = vmatpush.bf16.msra.mxu0 0
    %1340 = vmatpush.bf16.msra.mxu0 %v1329
    %1341 = vmatpush.bf16.msra.mxu0 %v1328
    %1342 = vmatpush.bf16.msra.mxu0 %v1327
    %1343 = vmatpush.bf16.msra.mxu0 %v1326
    %1344 = vmatmul.bf16.gmra.mxu0 %v1334
    %v1345 = vpop.f32.mrf.mxu0
    %v1346 = vadd.f32 0.0, %v1345
    %v1347 = vpop.f32.mrf.mxu0
    %1348 = vdwg.mxu0
    %v1349 = vadd.f32 %v1296, %v1346
    %s1350 = scalar_lea.vmem %s3, 224
    %v1351 = vld [vmem:[%s1350] sm:$0xf]
    %v1352 = vld [vmem:[%s1350 + $0x4] sm:$0xf]
    %v1353 = vld [vmem:[%s1350 + $0x8] sm:$0xf]
    %v1354 = vld [vmem:[%s1350 + $0xc] sm:$0xf]
    %v1355 = vld [vmem:[%s1350 + $0x10] sm:$0xf]
    %v1356 = vld [vmem:[%s1350 + $0x14] sm:$0xf]
    %v1357 = vld [vmem:[%s1350 + $0x18] sm:$0xf]
    %v1358 = vld [vmem:[%s1350 + $0x1c] sm:$0xf]
    %v1359 = vpack.i.b16 %v979, %v970
    %1361 = vst [vmem:[#allocation1] ss:$9 sm:$0xff] %v1359
    %v1362 = vld [vmem:[#allocation1] sm:$0xff]
    %v1371 = vunpack.c.l.b16 %v1351
    %v1372 = vunpack.c.l.b16 %v1352
    %v1373 = vunpack.c.l.b16 %v1353
    %v1374 = vunpack.c.l.b16 %v1354
    %v1375 = vunpack.c.l.b16 %v1355
    %v1376 = vunpack.c.l.b16 %v1356
    %v1377 = vunpack.c.l.b16 %v1357
    %v1378 = vunpack.c.l.b16 %v1358
    %v1379 = vpack.c.b16 %v1372, %v1371
    %v1380 = vpack.c.b16 %v1374, %v1373
    %v1381 = vpack.c.b16 %v1376, %v1375
    %v1382 = vpack.c.b16 %v1378, %v1377
    %v1387 = vsel %vm1026, %v1362, 0
    %1389 = vmatpush.bf16.msra.mxu0 0
    %1390 = vmatpush.bf16.msra.mxu0 0
    %1391 = vmatpush.bf16.msra.mxu0 0
    %1392 = vmatpush.bf16.msra.mxu0 0
    %1393 = vmatpush.bf16.msra.mxu0 %v1382
    %1394 = vmatpush.bf16.msra.mxu0 %v1381
    %1395 = vmatpush.bf16.msra.mxu0 %v1380
    %1396 = vmatpush.bf16.msra.mxu0 %v1379
    %1397 = vmatmul.bf16.gmra.mxu0 %v1387
    %v1398 = vpop.f32.mrf.mxu0
    %v1399 = vadd.f32 0.0, %v1398
    %v1400 = vpop.f32.mrf.mxu0
    %1401 = vdwg.mxu0
    %v1402 = vadd.f32 %v1349, %v1399
    %s1403 = scalar_lea.vmem %s3, 256
    %v1404 = vld [vmem:[%s1403] sm:$0xf]
    %v1405 = vld [vmem:[%s1403 + $0x4] sm:$0xf]
    %v1406 = vld [vmem:[%s1403 + $0x8] sm:$0xf]
    %v1407 = vld [vmem:[%s1403 + $0xc] sm:$0xf]
    %v1408 = vld [vmem:[%s1403 + $0x10] sm:$0xf]
    %v1409 = vld [vmem:[%s1403 + $0x14] sm:$0xf]
    %v1410 = vld [vmem:[%s1403 + $0x18] sm:$0xf]
    %v1411 = vld [vmem:[%s1403 + $0x1c] sm:$0xf]
    %v1412 = vpack.i.b16 %v980, %v971
    %1414 = vst [vmem:[#allocation1] ss:$9 sm:$0xff] %v1412
    %v1415 = vld [vmem:[#allocation1] sm:$0xff]
    %v1424 = vunpack.c.l.b16 %v1404
    %v1425 = vunpack.c.l.b16 %v1405
    %v1426 = vunpack.c.l.b16 %v1406
    %v1427 = vunpack.c.l.b16 %v1407
    %v1428 = vunpack.c.l.b16 %v1408
    %v1429 = vunpack.c.l.b16 %v1409
    %v1430 = vunpack.c.l.b16 %v1410
    %v1431 = vunpack.c.l.b16 %v1411
    %v1432 = vpack.c.b16 %v1425, %v1424
    %v1433 = vpack.c.b16 %v1427, %v1426
    %v1434 = vpack.c.b16 %v1429, %v1428
    %v1435 = vpack.c.b16 %v1431, %v1430
    %v1440 = vsel %vm1026, %v1415, 0
    %1442 = vmatpush.bf16.msra.mxu0 0
    %1443 = vmatpush.bf16.msra.mxu0 0
    %1444 = vmatpush.bf16.msra.mxu0 0
    %1445 = vmatpush.bf16.msra.mxu0 0
    %1446 = vmatpush.bf16.msra.mxu0 %v1435
    %1447 = vmatpush.bf16.msra.mxu0 %v1434
    %1448 = vmatpush.bf16.msra.mxu0 %v1433
    %1449 = vmatpush.bf16.msra.mxu0 %v1432
    %1450 = vmatmul.bf16.gmra.mxu0 %v1440
    %v1451 = vpop.f32.mrf.mxu0
    %v1452 = vadd.f32 0.0, %v1451
    %v1453 = vpop.f32.mrf.mxu0
    %1454 = vdwg.mxu0
    %v1455 = vadd.f32 %v1402, %v1452
    %v1456 = vld [vmem:[%s4] sm:$0x1]
    %v1458 = vperm.slane %v1456, 0
    %v1460 = vadd.f32 %v1455, %v1458
    %v1461 = vmax.f32 %v1460, 0.0
    %v1462 = vpack.c.bf16 %v1461, %v1461
    %v1463 = vld [vmem:[%s5] sm:$0xff]
    %v1464 = vld [vmem:[%s5 + $0x8] sm:$0xff]
    %v1465 = vld [vmem:[%s5 + $0x10] sm:$0xff]
    %v1466 = vld [vmem:[%s5 + $0x18] sm:$0xff]
    %v1467 = vld [vmem:[%s5 + $0x20] sm:$0xff]
    %v1468 = vld [vmem:[%s5 + $0x28] sm:$0xff]
    %v1469 = vld [vmem:[%s5 + $0x30] sm:$0xff]
    %v1470 = vld [vmem:[%s5 + $0x38] sm:$0xff]
    %v1471 = vld [vmem:[%s5 + $0x40] sm:$0xff]
    %v1472 = vld [vmem:[%s5 + $0x48] sm:$0xff]
    %v1473 = vld [vmem:[%s5 + $0x50] sm:$0xff]
    %v1474 = vld [vmem:[%s5 + $0x58] sm:$0xff]
    %v1475 = vld [vmem:[%s5 + $0x60] sm:$0xff]
    %v1476 = vld [vmem:[%s5 + $0x68] sm:$0xff]
    %v1477 = vld [vmem:[%s5 + $0x70] sm:$0xff]
    %v1478 = vld [vmem:[%s5 + $0x78] sm:$0xff]
    %v1479 = vld [vmem:[%s6] sm:$0xf]
    %v1481 = vperm.slane %v1479, 0
    %v1482 = vperm.slane %v1479, 1
    %v1483 = vperm.slane %v1479, 2
    %v1484 = vperm.slane %v1479, 3
    %v1505 = vunpack.c.l.b16 %v1463
    %v1506 = vunpack.c.h.b16 %v1463
    %v1507 = vunpack.c.l.b16 %v1464
    %v1508 = vunpack.c.h.b16 %v1464
    %v1509 = vunpack.c.l.b16 %v1465
    %v1510 = vunpack.c.h.b16 %v1465
    %v1511 = vunpack.c.l.b16 %v1466
    %v1512 = vunpack.c.h.b16 %v1466
    %v1513 = vunpack.c.l.b16 %v1467
    %v1514 = vunpack.c.h.b16 %v1467
    %v1515 = vunpack.c.l.b16 %v1468
    %v1516 = vunpack.c.h.b16 %v1468
    %v1517 = vunpack.c.l.b16 %v1469
    %v1518 = vunpack.c.h.b16 %v1469
    %v1519 = vunpack.c.l.b16 %v1470
    %v1520 = vunpack.c.h.b16 %v1470
    %v1521 = vunpack.c.l.b16 %v1471
    %v1522 = vunpack.c.h.b16 %v1471
    %v1523 = vunpack.c.l.b16 %v1472
    %v1524 = vunpack.c.h.b16 %v1472
    %v1525 = vunpack.c.l.b16 %v1473
    %v1526 = vunpack.c.h.b16 %v1473
    %v1527 = vunpack.c.l.b16 %v1474
    %v1528 = vunpack.c.h.b16 %v1474
    %v1529 = vunpack.c.l.b16 %v1475
    %v1530 = vunpack.c.h.b16 %v1475
    %v1531 = vunpack.c.l.b16 %v1476
    %v1532 = vunpack.c.h.b16 %v1476
    %v1533 = vunpack.c.l.b16 %v1477
    %v1534 = vunpack.c.h.b16 %v1477
    %v1535 = vunpack.c.l.b16 %v1478
    %v1536 = vunpack.c.h.b16 %v1478
    %v1537 = vpack.c.b16 %v1509, %v1505
    %v1538 = vpack.c.b16 %v1510, %v1506
    %v1539 = vpack.c.b16 %v1511, %v1507
    %v1540 = vpack.c.b16 %v1512, %v1508
    %v1541 = vpack.c.b16 %v1517, %v1513
    %v1542 = vpack.c.b16 %v1518, %v1514
    %v1543 = vpack.c.b16 %v1519, %v1515
    %v1544 = vpack.c.b16 %v1520, %v1516
    %v1545 = vpack.c.b16 %v1525, %v1521
    %v1546 = vpack.c.b16 %v1526, %v1522
    %v1547 = vpack.c.b16 %v1527, %v1523
    %v1548 = vpack.c.b16 %v1528, %v1524
    %v1549 = vpack.c.b16 %v1533, %v1529
    %v1550 = vpack.c.b16 %v1534, %v1530
    %v1551 = vpack.c.b16 %v1535, %v1531
    %v1552 = vpack.c.b16 %v1536, %v1532
    %v1570 = vsel %vm1026, %v1462, 0
    %1572 = vmatpush.bf16.msra.mxu0 0
    %1573 = vmatpush.bf16.msra.mxu0 0
    %1574 = vmatpush.bf16.msra.mxu0 0
    %1575 = vmatpush.bf16.msra.mxu0 0
    %1576 = vmatpush.bf16.msra.mxu0 %v1549
    %1577 = vmatpush.bf16.msra.mxu0 %v1545
    %1578 = vmatpush.bf16.msra.mxu0 %v1541
    %1579 = vmatpush.bf16.msra.mxu0 %v1537
    %1580 = vmatmul.bf16.gmra.mxu0 %v1570
    %v1581 = vpop.f32.mrf.mxu0
    %v1582 = vadd.f32 %v1481, %v1581
    %v1583 = vpop.f32.mrf.mxu0
    %1584 = vdwg.mxu0
    %1585 = vmatpush.bf16.msra.mxu0 0
    %1586 = vmatpush.bf16.msra.mxu0 0
    %1587 = vmatpush.bf16.msra.mxu0 0
    %1588 = vmatpush.bf16.msra.mxu0 0
    %1589 = vmatpush.bf16.msra.mxu0 %v1550
    %1590 = vmatpush.bf16.msra.mxu0 %v1546
    %1591 = vmatpush.bf16.msra.mxu0 %v1542
    %1592 = vmatpush.bf16.msra.mxu0 %v1538
    %1593 = vmatmul.bf16.gmra.mxu0 %v1570
    %v1594 = vpop.f32.mrf.mxu0
    %v1595 = vadd.f32 %v1482, %v1594
    %v1596 = vpop.f32.mrf.mxu0
    %1597 = vdwg.mxu0
    %1598 = vmatpush.bf16.msra.mxu0 0
    %1599 = vmatpush.bf16.msra.mxu0 0
    %1600 = vmatpush.bf16.msra.mxu0 0
    %1601 = vmatpush.bf16.msra.mxu0 0
    %1602 = vmatpush.bf16.msra.mxu0 %v1551
    %1603 = vmatpush.bf16.msra.mxu0 %v1547
    %1604 = vmatpush.bf16.msra.mxu0 %v1543
    %1605 = vmatpush.bf16.msra.mxu0 %v1539
    %1606 = vmatmul.bf16.gmra.mxu0 %v1570
    %v1607 = vpop.f32.mrf.mxu0
    %v1608 = vadd.f32 %v1483, %v1607
    %v1609 = vpop.f32.mrf.mxu0
    %1610 = vdwg.mxu0
    %1611 = vmatpush.bf16.msra.mxu0 0
    %1612 = vmatpush.bf16.msra.mxu0 0
    %1613 = vmatpush.bf16.msra.mxu0 0
    %1614 = vmatpush.bf16.msra.mxu0 0
    %1615 = vmatpush.bf16.msra.mxu0 %v1552
    %1616 = vmatpush.bf16.msra.mxu0 %v1548
    %1617 = vmatpush.bf16.msra.mxu0 %v1544
    %1618 = vmatpush.bf16.msra.mxu0 %v1540
    %1619 = vmatmul.bf16.gmra.mxu0 %v1570
    %v1620 = vpop.f32.mrf.mxu0
    %v1621 = vadd.f32 %v1484, %v1620
    %v1622 = vpop.f32.mrf.mxu0
    %1623 = vdwg.mxu0
    %v1624 = vmax.f32 %v1582, 0.0
    %v1625 = vmax.f32 %v1595, 0.0
    %v1626 = vmax.f32 %v1608, 0.0
    %v1627 = vmax.f32 %v1621, 0.0
    %v1628 = vpack.c.bf16 %v1624, %v1624
    %v1629 = vpack.c.bf16 %v1625, %v1625
    %v1630 = vpack.c.bf16 %v1626, %v1626
    %v1631 = vpack.c.bf16 %v1627, %v1627
    %v1632 = vld [vmem:[%s7] sm:$0xf]
    %v1633 = vld [vmem:[%s7 + $0x4] sm:$0xf]
    %v1634 = vld [vmem:[%s7 + $0x8] sm:$0xf]
    %v1635 = vld [vmem:[%s7 + $0xc] sm:$0xf]
    %v1636 = vld [vmem:[%s7 + $0x10] sm:$0xf]
    %v1637 = vld [vmem:[%s7 + $0x14] sm:$0xf]
    %v1638 = vld [vmem:[%s7 + $0x18] sm:$0xf]
    %v1639 = vld [vmem:[%s7 + $0x1c] sm:$0xf]
    %v1640 = vld [vmem:[%s7 + $0x20] sm:$0xf]
    %v1641 = vld [vmem:[%s7 + $0x24] sm:$0xf]
    %v1642 = vld [vmem:[%s7 + $0x28] sm:$0xf]
    %v1643 = vld [vmem:[%s7 + $0x2c] sm:$0xf]
    %v1644 = vld [vmem:[%s7 + $0x30] sm:$0xf]
    %v1645 = vld [vmem:[%s7 + $0x34] sm:$0xf]
    %v1646 = vld [vmem:[%s7 + $0x38] sm:$0xf]
    %v1647 = vld [vmem:[%s7 + $0x3c] sm:$0xf]
    %v1648 = vld [vmem:[%s7 + $0x40] sm:$0xf]
    %v1649 = vld [vmem:[%s7 + $0x44] sm:$0xf]
    %v1650 = vld [vmem:[%s7 + $0x48] sm:$0xf]
    %v1651 = vld [vmem:[%s7 + $0x4c] sm:$0xf]
    %v1652 = vld [vmem:[%s7 + $0x50] sm:$0xf]
    %v1653 = vld [vmem:[%s7 + $0x54] sm:$0xf]
    %v1654 = vld [vmem:[%s7 + $0x58] sm:$0xf]
    %v1655 = vld [vmem:[%s7 + $0x5c] sm:$0xf]
    %v1656 = vld [vmem:[%s7 + $0x60] sm:$0xf]
    %v1657 = vld [vmem:[%s7 + $0x64] sm:$0xf]
    %v1658 = vld [vmem:[%s7 + $0x68] sm:$0xf]
    %v1659 = vld [vmem:[%s7 + $0x6c] sm:$0xf]
    %v1660 = vld [vmem:[%s7 + $0x70] sm:$0xf]
    %v1661 = vld [vmem:[%s7 + $0x74] sm:$0xf]
    %v1662 = vld [vmem:[%s7 + $0x78] sm:$0xf]
    %v1663 = vld [vmem:[%s7 + $0x7c] sm:$0xf]
    %v1664 = vld [vmem:[%s7 + $0x80] sm:$0xf]
    %v1665 = vld [vmem:[%s7 + $0x84] sm:$0xf]
    %v1666 = vld [vmem:[%s7 + $0x88] sm:$0xf]
    %v1667 = vld [vmem:[%s7 + $0x8c] sm:$0xf]
    %v1668 = vld [vmem:[%s7 + $0x90] sm:$0xf]
    %v1669 = vld [vmem:[%s7 + $0x94] sm:$0xf]
    %v1670 = vld [vmem:[%s7 + $0x98] sm:$0xf]
    %v1671 = vld [vmem:[%s7 + $0x9c] sm:$0xf]
    %v1672 = vld [vmem:[%s7 + $0xa0] sm:$0xf]
    %v1673 = vld [vmem:[%s7 + $0xa4] sm:$0xf]
    %v1674 = vld [vmem:[%s7 + $0xa8] sm:$0xf]
    %v1675 = vld [vmem:[%s7 + $0xac] sm:$0xf]
    %v1676 = vld [vmem:[%s7 + $0xb0] sm:$0xf]
    %v1677 = vld [vmem:[%s7 + $0xb4] sm:$0xf]
    %v1678 = vld [vmem:[%s7 + $0xb8] sm:$0xf]
    %v1679 = vld [vmem:[%s7 + $0xbc] sm:$0xf]
    %v1680 = vld [vmem:[%s7 + $0xc0] sm:$0xf]
    %v1681 = vld [vmem:[%s7 + $0xc4] sm:$0xf]
    %v1682 = vld [vmem:[%s7 + $0xc8] sm:$0xf]
    %v1683 = vld [vmem:[%s7 + $0xcc] sm:$0xf]
    %v1684 = vld [vmem:[%s7 + $0xd0] sm:$0xf]
    %v1685 = vld [vmem:[%s7 + $0xd4] sm:$0xf]
    %v1686 = vld [vmem:[%s7 + $0xd8] sm:$0xf]
    %v1687 = vld [vmem:[%s7 + $0xdc] sm:$0xf]
    %v1688 = vld [vmem:[%s7 + $0xe0] sm:$0xf]
    %v1689 = vld [vmem:[%s7 + $0xe4] sm:$0xf]
    %v1690 = vld [vmem:[%s7 + $0xe8] sm:$0xf]
    %v1691 = vld [vmem:[%s7 + $0xec] sm:$0xf]
    %v1692 = vld [vmem:[%s7 + $0xf0] sm:$0xf]
    %v1693 = vld [vmem:[%s7 + $0xf4] sm:$0xf]
    %v1694 = vld [vmem:[%s7 + $0xf8] sm:$0xf]
    %v1695 = vld [vmem:[%s7 + $0xfc] sm:$0xf]
    %v1696 = vld [vmem:[%s8] sm:$0x1]
    %v1698 = vperm.slane %v1696, 0
    %v1764 = vunpack.c.l.b16 %v1632
    %v1765 = vunpack.c.l.b16 %v1633
    %v1766 = vunpack.c.l.b16 %v1634
    %v1767 = vunpack.c.l.b16 %v1635
    %v1768 = vunpack.c.l.b16 %v1636
    %v1769 = vunpack.c.l.b16 %v1637
    %v1770 = vunpack.c.l.b16 %v1638
    %v1771 = vunpack.c.l.b16 %v1639
    %v1772 = vunpack.c.l.b16 %v1640
    %v1773 = vunpack.c.l.b16 %v1641
    %v1774 = vunpack.c.l.b16 %v1642
    %v1775 = vunpack.c.l.b16 %v1643
    %v1776 = vunpack.c.l.b16 %v1644
    %v1777 = vunpack.c.l.b16 %v1645
    %v1778 = vunpack.c.l.b16 %v1646
    %v1779 = vunpack.c.l.b16 %v1647
    %v1780 = vunpack.c.l.b16 %v1648
    %v1781 = vunpack.c.l.b16 %v1649
    %v1782 = vunpack.c.l.b16 %v1650
    %v1783 = vunpack.c.l.b16 %v1651
    %v1784 = vunpack.c.l.b16 %v1652
    %v1785 = vunpack.c.l.b16 %v1653
    %v1786 = vunpack.c.l.b16 %v1654
    %v1787 = vunpack.c.l.b16 %v1655
    %v1788 = vunpack.c.l.b16 %v1656
    %v1789 = vunpack.c.l.b16 %v1657
    %v1790 = vunpack.c.l.b16 %v1658
    %v1791 = vunpack.c.l.b16 %v1659
    %v1792 = vunpack.c.l.b16 %v1660
    %v1793 = vunpack.c.l.b16 %v1661
    %v1794 = vunpack.c.l.b16 %v1662
    %v1795 = vunpack.c.l.b16 %v1663
    %v1796 = vunpack.c.l.b16 %v1664
    %v1797 = vunpack.c.l.b16 %v1665
    %v1798 = vunpack.c.l.b16 %v1666
    %v1799 = vunpack.c.l.b16 %v1667
    %v1800 = vunpack.c.l.b16 %v1668
    %v1801 = vunpack.c.l.b16 %v1669
    %v1802 = vunpack.c.l.b16 %v1670
    %v1803 = vunpack.c.l.b16 %v1671
    %v1804 = vunpack.c.l.b16 %v1672
    %v1805 = vunpack.c.l.b16 %v1673
    %v1806 = vunpack.c.l.b16 %v1674
    %v1807 = vunpack.c.l.b16 %v1675
    %v1808 = vunpack.c.l.b16 %v1676
    %v1809 = vunpack.c.l.b16 %v1677
    %v1810 = vunpack.c.l.b16 %v1678
    %v1811 = vunpack.c.l.b16 %v1679
    %v1812 = vunpack.c.l.b16 %v1680
    %v1813 = vunpack.c.l.b16 %v1681
    %v1814 = vunpack.c.l.b16 %v1682
    %v1815 = vunpack.c.l.b16 %v1683
    %v1816 = vunpack.c.l.b16 %v1684
    %v1817 = vunpack.c.l.b16 %v1685
    %v1818 = vunpack.c.l.b16 %v1686
    %v1819 = vunpack.c.l.b16 %v1687
    %v1820 = vunpack.c.l.b16 %v1688
    %v1821 = vunpack.c.l.b16 %v1689
    %v1822 = vunpack.c.l.b16 %v1690
    %v1823 = vunpack.c.l.b16 %v1691
    %v1824 = vunpack.c.l.b16 %v1692
    %v1825 = vunpack.c.l.b16 %v1693
    %v1826 = vunpack.c.l.b16 %v1694
    %v1827 = vunpack.c.l.b16 %v1695
    %v1828 = vpack.c.b16 %v1765, %v1764
    %v1829 = vpack.c.b16 %v1767, %v1766
    %v1830 = vpack.c.b16 %v1769, %v1768
    %v1831 = vpack.c.b16 %v1771, %v1770
    %v1832 = vpack.c.b16 %v1773, %v1772
    %v1833 = vpack.c.b16 %v1775, %v1774
    %v1834 = vpack.c.b16 %v1777, %v1776
    %v1835 = vpack.c.b16 %v1779, %v1778
    %v1836 = vpack.c.b16 %v1781, %v1780
    %v1837 = vpack.c.b16 %v1783, %v1782
    %v1838 = vpack.c.b16 %v1785, %v1784
    %v1839 = vpack.c.b16 %v1787, %v1786
    %v1840 = vpack.c.b16 %v1789, %v1788
    %v1841 = vpack.c.b16 %v1791, %v1790
    %v1842 = vpack.c.b16 %v1793, %v1792
    %v1843 = vpack.c.b16 %v1795, %v1794
    %v1844 = vpack.c.b16 %v1797, %v1796
    %v1845 = vpack.c.b16 %v1799, %v1798
    %v1846 = vpack.c.b16 %v1801, %v1800
    %v1847 = vpack.c.b16 %v1803, %v1802
    %v1848 = vpack.c.b16 %v1805, %v1804
    %v1849 = vpack.c.b16 %v1807, %v1806
    %v1850 = vpack.c.b16 %v1809, %v1808
    %v1851 = vpack.c.b16 %v1811, %v1810
    %v1852 = vpack.c.b16 %v1813, %v1812
    %v1853 = vpack.c.b16 %v1815, %v1814
    %v1854 = vpack.c.b16 %v1817, %v1816
    %v1855 = vpack.c.b16 %v1819, %v1818
    %v1856 = vpack.c.b16 %v1821, %v1820
    %v1857 = vpack.c.b16 %v1823, %v1822
    %v1858 = vpack.c.b16 %v1825, %v1824
    %v1859 = vpack.c.b16 %v1827, %v1826
    %1892 = vmatpush.bf16.msra.mxu0 %v1835
    %1893 = vmatpush.bf16.msra.mxu0 %v1834
    %1894 = vmatpush.bf16.msra.mxu0 %v1833
    %1895 = vmatpush.bf16.msra.mxu0 %v1832
    %1896 = vmatpush.bf16.msra.mxu0 %v1831
    %1897 = vmatpush.bf16.msra.mxu0 %v1830
    %1898 = vmatpush.bf16.msra.mxu0 %v1829
    %1899 = vmatpush.bf16.msra.mxu0 %v1828
    %1900 = vmatmul.bf16.gmra.mxu0 %v1628
    %v1901 = vpop.f32.mrf.mxu0
    %v1902 = vadd.f32 %v1698, %v1901
    %v1903 = vpop.f32.mrf.mxu0
    %1904 = vdwg.mxu0
    %1905 = vmatpush.bf16.msra.mxu0 %v1843
    %1906 = vmatpush.bf16.msra.mxu0 %v1842
    %1907 = vmatpush.bf16.msra.mxu0 %v1841
    %1908 = vmatpush.bf16.msra.mxu0 %v1840
    %1909 = vmatpush.bf16.msra.mxu0 %v1839
    %1910 = vmatpush.bf16.msra.mxu0 %v1838
    %1911 = vmatpush.bf16.msra.mxu0 %v1837
    %1912 = vmatpush.bf16.msra.mxu0 %v1836
    %1913 = vmatmul.bf16.gmra.mxu0 %v1629
    %v1914 = vpop.f32.mrf.mxu0
    %v1915 = vadd.f32 %v1902, %v1914
    %v1916 = vpop.f32.mrf.mxu0
    %1917 = vdwg.mxu0
    %1918 = vmatpush.bf16.msra.mxu0 %v1851
    %1919 = vmatpush.bf16.msra.mxu0 %v1850
    %1920 = vmatpush.bf16.msra.mxu0 %v1849
    %1921 = vmatpush.bf16.msra.mxu0 %v1848
    %1922 = vmatpush.bf16.msra.mxu0 %v1847
    %1923 = vmatpush.bf16.msra.mxu0 %v1846
    %1924 = vmatpush.bf16.msra.mxu0 %v1845
    %1925 = vmatpush.bf16.msra.mxu0 %v1844
    %1926 = vmatmul.bf16.gmra.mxu0 %v1630
    %v1927 = vpop.f32.mrf.mxu0
    %v1928 = vadd.f32 %v1915, %v1927
    %v1929 = vpop.f32.mrf.mxu0
    %1930 = vdwg.mxu0
    %1931 = vmatpush.bf16.msra.mxu0 %v1859
    %1932 = vmatpush.bf16.msra.mxu0 %v1858
    %1933 = vmatpush.bf16.msra.mxu0 %v1857
    %1934 = vmatpush.bf16.msra.mxu0 %v1856
    %1935 = vmatpush.bf16.msra.mxu0 %v1855
    %1936 = vmatpush.bf16.msra.mxu0 %v1854
    %1937 = vmatpush.bf16.msra.mxu0 %v1853
    %1938 = vmatpush.bf16.msra.mxu0 %v1852
    %1939 = vmatmul.bf16.gmra.mxu0 %v1631
    %v1940 = vpop.f32.mrf.mxu0
    %v1941 = vadd.f32 %v1928, %v1940
    %v1942 = vpop.f32.mrf.mxu0
    %1943 = vdwg.mxu0
    %vm1944 = vcmask 41984
    %1945 = vst.msk [vmem:[#allocation2] sm:$0x3] %vm1944, %v1941
    // Predicated region
    $region38: #{_lambda_.3} parent=1 // pred_check
      _
    $region39: #{_lambda_.3} parent=1 // pred_check_branch
      %1947 = sbr.rel (0) target = $region41
    $region40: #{_lambda_.3} parent=1 // pred_region
      %1949 = vsyncadd [#allocation3], 0
      %s1951 = sshll.u32 [#allocation2], 4
      %s1952 = int_to_ptr.vmem [resolvable:$true] %s1951
      %s1953 = sshll.u32 %s9, 4
      %s1954 = int_to_ptr.hbm [resolvable:$true] %s1953
      %1956 = dma.vmem_to_hbm [thread:$0]  %s1952, 32, %s1954, [#allocation3]
    $region41: #{_lambda_.3} parent=1 // pred_fallthru
      _
    // Predicated region
    $region42: #{_lambda_.3} parent=1 // pred_check
      _
    $region43: #{_lambda_.3} parent=1 // pred_check_branch
      %1958 = sbr.rel (0) target = $region45
    $region44: #{_lambda_.3} parent=1 // pred_region
      %1960 = dma.done [#allocation3], 32
    $region45: #{_lambda_.3} parent=1 // pred_fallthru
      _
    %1961 = vsyncpa [#allocation3], 1

</llo_original>
